<compile_context>
chip_gen: v7x
topology: tpu7x:2x2x1
jax: 0.10.0
libtpu: 0.0.40
codegen_flags: <defaults>
</compile_context>

<pallas_src>
import functools

import jax
import jax.numpy as jnp
import numpy as np
from jax.experimental import pallas as pl
from jax.experimental.pallas import tpu as pltpu


def _round_up(x, m):
    return (x + m - 1) // m * m


def _device_kind():
    try:
        return jax.devices()[0].device_kind.lower()
    except Exception:
        return ""


def _vmem_capacity_bytes():
    try:
        cap = int(pltpu.get_tpu_info().vmem_capacity_bytes)
        if cap > 0:
            return cap
    except Exception:
        pass
    kind = _device_kind()
    if ("v7" in kind) or ("tpu7" in kind):
        return 64 * 1024 * 1024
    return 128 * 1024 * 1024


def _mlp_kernel(x_ref, w1_ref, b1_ref, w2_ref, b2_ref, o_ref, acc_ref, *,
                compute_dtype, ew_dtype, approx_gelu):
    h_idx = pl.program_id(1)

    @pl.when(h_idx == 0)
    def _init():
        acc_ref[...] = jnp.zeros_like(acc_ref)

    # fc1 on the MXU with f32 accumulation.  x is cast in-kernel (free filler
    # under the MXU) so the wrapper never materializes a bf16 copy in HBM.
    x = x_ref[...].astype(compute_dtype)
    h = jnp.dot(x, w1_ref[...], preferred_element_type=jnp.float32)

    # Bias + GELU on VPU/EUP.  bf16 on v6e/v7x (packed sublanes halve the
    # elementwise op count), f32 on v5e.  tanh-approx GELU -> EUP slot.
    h = h.astype(ew_dtype) + b1_ref[...].astype(ew_dtype)
    h = jax.nn.gelu(h, approximate=approx_gelu)

    # fc2 partial product, accumulated in f32 across the H grid axis.
    acc_ref[...] += jnp.dot(h.astype(compute_dtype), w2_ref[...],
                            preferred_element_type=jnp.float32)

    @pl.when(h_idx == pl.num_programs(1) - 1)
    def _finalize():
        o = acc_ref[...] + b2_ref[...].astype(jnp.float32)
        o_ref[...] = o.astype(o_ref.dtype)


@functools.partial(
    jax.jit,
    static_argnames=("tm", "compute_dtype", "approx_gelu", "out_dtype"))
def mlp_pallas(x, w1, b1, w2, b2, *, tm=None, compute_dtype=jnp.bfloat16,
               approx_gelu=True, out_dtype=None):
    """x: (B, N, C_in); w1: (C_in, H); b1: (H,); w2: (H, C_out); b2: (C_out,)."""
    B, N, C_in = x.shape
    H = w1.shape[1]
    C_out = w2.shape[1]
    out_dtype = out_dtype or x.dtype
    M = B * N

    kind = _device_kind()
    is_v7 = ("v7" in kind) or ("tpu7" in kind)
    is_v6 = "v6" in kind
    modern = is_v6 or is_v7

    cdt = np.dtype(compute_dtype)
    # Elementwise dtype: bf16 only where the VALU/EUP are bf16-native.
    ew_dtype = jnp.bfloat16 if (cdt == np.dtype(jnp.bfloat16) and modern) \
        else jnp.float32

    if tm is None:
        # v6e: large tiles amortize per-step overhead within 128 MiB VMEM;
        # v7x / v5e / unknown: keep tiles <=256 (VMEM / f32-intermediate).
        tm = 512 if (is_v6 and not is_v7) else 256
    assert tm % 8 == 0, "row tile must be a multiple of the 8-sublane granule"

    tm_eff = min(tm, _round_up(M, 8))
    # On v7x guarantee >=2 M-grid steps so ("parallel", ...) actually shards
    # across the two TensorCores instead of idling one of them.
    if is_v7 and _round_up(M, 8) >= 16 and _round_up(M, tm_eff) // tm_eff < 2:
        tm_eff = _round_up(-(-M // 2), 8)
    Mp = _round_up(M, tm_eff)

    x_item = np.dtype(x.dtype).itemsize
    c_item = cdt.itemsize
    ew_item = np.dtype(ew_dtype).itemsize
    o_item = np.dtype(out_dtype).itemsize

    cap = _vmem_capacity_bytes()
    budget = int(cap * 0.8)          # leave headroom for compiler scratch

    def vmem_est(th_):
        return (2 * tm_eff * C_in * x_item          # x row tile (dbl-buffered)
                + 2 * C_in * th_ * c_item           # W1 block
                + 2 * th_ * 4                       # b1 block
                + 2 * th_ * C_out * c_item          # W2 block
                + 2 * C_out * 4                     # b2
                + 2 * tm_eff * C_out * o_item       # out row tile
                + tm_eff * C_out * 4                # f32 accumulator scratch
                + tm_eff * th_ * (4 + ew_item + c_item))  # fc1 intermediate

    # Pick the hidden tile: fully resident if it fits, otherwise halve H
    # (keeping a multiple of 128 that divides H) until the budget is met.
    th = H
    while (int(vmem_est(th) * 1.3) > budget and th % 256 == 0
           and H % (th // 2) == 0):
        th //= 2
    nh = H // th

    vmem_limit = int(min(max(vmem_est(th) * 1.3, 16 * 1024 * 1024), budget))

    cost = pl.CostEstimate(
        flops=2 * Mp * H * (C_in + C_out),
        transcendentals=(Mp * H if approx_gelu else 0),
        bytes_accessed=(M * C_in * x_item
                        + (Mp // tm_eff if nh > 1 else 1)
                        * (C_in * H + H * C_out) * c_item
                        + Mp * C_out * o_item),
    )

    # Only cast weights when they are not already pre-cast at parameter setup.
    w1c = w1 if w1.dtype == cdt else w1.astype(cdt)
    w2c = w2 if w2.dtype == cdt else w2.astype(cdt)
    b1_2d = b1.reshape(1, H).astype(jnp.float32)
    b2_2d = b2.reshape(1, C_out).astype(jnp.float32)

    x2d = x.reshape(M, C_in)
    if Mp != M:
        x2d = jnp.pad(x2d, ((0, Mp - M), (0, 0)))

    kernel = functools.partial(_mlp_kernel, compute_dtype=cdt,
                               ew_dtype=ew_dtype, approx_gelu=approx_gelu)

    out2d = pl.pallas_call(
        kernel,
        out_shape=jax.ShapeDtypeStruct((Mp, C_out), out_dtype),
        grid_spec=pltpu.PrefetchScalarGridSpec(
            num_scalar_prefetch=0,
            grid=(Mp // tm_eff, nh),
            in_specs=[
                pl.BlockSpec((tm_eff, C_in), lambda i, h: (i, 0)),   # x rows
                pl.BlockSpec((C_in, th), lambda i, h: (0, h)),       # W1
                pl.BlockSpec((1, th), lambda i, h: (0, h)),          # b1
                pl.BlockSpec((th, C_out), lambda i, h: (h, 0)),      # W2
                pl.BlockSpec((1, C_out), lambda i, h: (0, 0)),       # b2
            ],
            out_specs=pl.BlockSpec((tm_eff, C_out), lambda i, h: (i, 0)),
            scratch_shapes=[pltpu.VMEM((tm_eff, C_out), jnp.float32)],
        ),
        compiler_params=pltpu.CompilerParams(
            dimension_semantics=("parallel", "arbitrary"),
            vmem_limit_bytes=vmem_limit,
        ),
        cost_estimate=cost,
    )(x2d, w1c, b1_2d, w2c, b2_2d)

    if Mp != M:
        out2d = out2d[:M]
    return out2d.reshape(B, N, C_out)


def _ref_mlp(x, w1, b1, w2, b2):
    h = jax.nn.gelu(x @ w1 + b1, approximate=False)
    return h @ w2 + b2


if __name__ == "__main__":
    ks = jax.random.split(jax.random.PRNGKey(0), 10)

    # --- Test 1: lane-aligned ViT-ish shapes, bf16 matmuls, tanh-GELU ---
    B, N, C_in, Hid, C_out = 2, 128, 128, 256, 128
    x = jax.random.normal(ks[0], (B, N, C_in), dtype=jnp.float32)
    w1 = jax.random.normal(ks[1], (C_in, Hid), dtype=jnp.float32) / jnp.sqrt(C_in)
    b1 = jax.random.normal(ks[2], (Hid,), dtype=jnp.float32) * 0.01
    w2 = jax.random.normal(ks[3], (Hid, C_out), dtype=jnp.float32) / jnp.sqrt(Hid)
    b2 = jax.random.normal(ks[4], (C_out,), dtype=jnp.float32) * 0.01

    # Pre-cast weights once at "parameter setup" (no per-call HBM round trip).
    w1_bf, w2_bf = w1.astype(jnp.bfloat16), w2.astype(jnp.bfloat16)

    out = jax.block_until_ready(
        mlp_pallas(x, w1_bf, b1, w2_bf, b2, compute_dtype=jnp.bfloat16,
                   approx_gelu=True))
    ref = _ref_mlp(x, w1, b1, w2, b2)
    assert out.shape == (B, N, C_out)
    assert jnp.allclose(out, ref, atol=1e-1, rtol=1e-1), \
        "bf16 path mismatch vs reference"

    # --- Test 2: small / ragged shapes, exact erf-GELU f32 path (M-padding) ---
    B, N, C_in, Hid, C_out = 2, 7, 32, 64, 32
    x = jax.random.normal(ks[5], (B, N, C_in), dtype=jnp.float32)
    w1 = jax.random.normal(ks[6], (C_in, Hid), dtype=jnp.float32) / jnp.sqrt(C_in)
    b1 = jax.random.normal(ks[7], (Hid,), dtype=jnp.float32) * 0.01
    w2 = jax.random.normal(ks[8], (Hid, C_out), dtype=jnp.float32) / jnp.sqrt(Hid)
    b2 = jax.random.normal(ks[9], (C_out,), dtype=jnp.float32) * 0.01

    out = jax.block_until_ready(
        mlp_pallas(x, w1, b1, w2, b2, compute_dtype=jnp.float32,
                   approx_gelu=False))
    ref = _ref_mlp(x, w1, b1, w2, b2)
    assert out.shape == (B, N, C_out)
    assert jnp.allclose(out, ref, atol=1e-4, rtol=1e-4), \
        "f32 path mismatch vs reference"

    print("KERNEL_OK")
</pallas_src>

<mosaic_0001>
module attributes {stable_mosaic.version = 11 : i64} {
  func.func @_mlp_kernel(%arg0: i32, %arg1: i32, %arg2: memref<256x128xf32, #tpu.memory_space<vmem>>, %arg3: memref<128x256xbf16, #tpu.memory_space<vmem>>, %arg4: memref<1x256xf32, #tpu.memory_space<vmem>>, %arg5: memref<256x128xbf16, #tpu.memory_space<vmem>>, %arg6: memref<1x128xf32, #tpu.memory_space<vmem>>, %arg7: memref<256x128xf32, #tpu.memory_space<vmem>>, %arg8: memref<256x128xf32, #tpu.memory_space<vmem>>) attributes {dimension_semantics = [#tpu.dimension_semantics<parallel>, #tpu.dimension_semantics<arbitrary>], iteration_bounds = array<i64: 1, 1>, scalar_prefetch = 0 : i64, scratch_operands = 1 : i64, tpu.core_type = #tpu.core_type<tc>, window_params = [{transform_indices = @transform_0, window_bounds = array<i64: 256, 128>}, {transform_indices = @transform_1, window_bounds = array<i64: 128, 256>}, {transform_indices = @transform_2, window_bounds = array<i64: 1, 256>}, {transform_indices = @transform_3, window_bounds = array<i64: 256, 128>}, {pipeline_mode = #tpu.pipeline_mode<synchronous>, transform_indices = @transform_4, window_bounds = array<i64: 1, 128>}, {transform_indices = @transform_5, window_bounds = array<i64: 256, 128>}]} {
    %c0_i32 = arith.constant 0 : i32
    %0 = arith.cmpi eq, %arg1, %c0_i32 : i32
    %1 = arith.extui %0 : i1 to i32
    %c0_i32_0 = arith.constant 0 : i32
    %2 = arith.cmpi ne, %1, %c0_i32_0 : i32
    scf.if %2 {
      %cst_19 = arith.constant 0.000000e+00 : f32
      %32 = vector.broadcast %cst_19 : f32 to vector<256x128xf32>
      %c0_20 = arith.constant 0 : index
      %c0_21 = arith.constant 0 : index
      %33 = vector.load %arg8[%c0_20, %c0_21] : memref<256x128xf32, #tpu.memory_space<vmem>>, vector<256x128xf32>
      tpu.vector_store %arg8[%c0_20, %c0_21], %32 {strides = array<i32>} : memref<256x128xf32, #tpu.memory_space<vmem>>, vector<256x128xf32>,
    } else {
    }
    %c0 = arith.constant 0 : index
    %c0_1 = arith.constant 0 : index
    %3 = vector.load %arg2[%c0, %c0_1] : memref<256x128xf32, #tpu.memory_space<vmem>>, vector<256x128xf32>
    %4 = arith.truncf %3 : vector<256x128xf32> to vector<256x128xbf16>
    %c0_2 = arith.constant 0 : index
    %c0_3 = arith.constant 0 : index
    %5 = vector.load %arg3[%c0_2, %c0_3] : memref<128x256xbf16, #tpu.memory_space<vmem>>, vector<128x256xbf16>
    %cst = arith.constant dense<0.000000e+00> : vector<256x256xf32>
    %6 = tpu.matmul %4, %5, %cst {dimension_numbers = #tpu.dot_dimension_numbers<[1], [0], [0], [1], [0, 0, 1, 1], [], []>} : vector<256x128xbf16>, vector<128x256xbf16>, vector<256x256xf32> -> vector<256x256xf32>
    %c0_4 = arith.constant 0 : index
    %c0_5 = arith.constant 0 : index
    %7 = vector.load %arg4[%c0_4, %c0_5] : memref<1x256xf32, #tpu.memory_space<vmem>>, vector<1x256xf32>
    %8 = vector.broadcast %7 : vector<1x256xf32> to vector<256x256xf32>
    %9 = arith.addf %6, %8 : vector<256x256xf32>
    %10 = arith.mulf %9, %9 : vector<256x256xf32>
    %11 = arith.mulf %9, %10 : vector<256x256xf32>
    %cst_6 = arith.constant 4.471500e-02 : f32
    %12 = vector.broadcast %cst_6 : f32 to vector<256x256xf32>
    %13 = arith.mulf %12, %11 : vector<256x256xf32>
    %14 = arith.addf %9, %13 : vector<256x256xf32>
    %cst_7 = arith.constant 0.797884583 : f32
    %15 = vector.broadcast %cst_7 : f32 to vector<256x256xf32>
    %16 = arith.mulf %15, %14 : vector<256x256xf32>
    %17 = math.tanh %16 : vector<256x256xf32>
    %cst_8 = arith.constant 1.000000e+00 : f32
    %18 = vector.broadcast %cst_8 : f32 to vector<256x256xf32>
    %19 = arith.addf %18, %17 : vector<256x256xf32>
    %cst_9 = arith.constant 5.000000e-01 : f32
    %20 = vector.broadcast %cst_9 : f32 to vector<256x256xf32>
    %21 = arith.mulf %20, %19 : vector<256x256xf32>
    %22 = arith.mulf %9, %21 : vector<256x256xf32>
    %c0_10 = arith.constant 0 : index
    %c0_11 = arith.constant 0 : index
    %23 = vector.load %arg8[%c0_10, %c0_11] : memref<256x128xf32, #tpu.memory_space<vmem>>, vector<256x128xf32>
    %24 = arith.truncf %22 : vector<256x256xf32> to vector<256x256xbf16>
    %c0_12 = arith.constant 0 : index
    %c0_13 = arith.constant 0 : index
    %25 = vector.load %arg5[%c0_12, %c0_13] : memref<256x128xbf16, #tpu.memory_space<vmem>>, vector<256x128xbf16>
    %cst_14 = arith.constant dense<0.000000e+00> : vector<256x128xf32>
    %26 = tpu.matmul %24, %25, %cst_14 {dimension_numbers = #tpu.dot_dimension_numbers<[1], [0], [0], [1], [0, 0, 1, 1], [], []>} : vector<256x256xbf16>, vector<256x128xbf16>, vector<256x128xf32> -> vector<256x128xf32>
    %27 = arith.addf %23, %26 : vector<256x128xf32>
    %c0_15 = arith.constant 0 : index
    %c0_16 = arith.constant 0 : index
    %28 = vector.load %arg8[%c0_15, %c0_16] : memref<256x128xf32, #tpu.memory_space<vmem>>, vector<256x128xf32>
    tpu.vector_store %arg8[%c0_15, %c0_16], %27 {strides = array<i32>} : memref<256x128xf32, #tpu.memory_space<vmem>>, vector<256x128xf32>,
    %c0_i32_17 = arith.constant 0 : i32
    %29 = arith.cmpi eq, %arg1, %c0_i32_17 : i32
    %30 = arith.extui %29 : i1 to i32
    %c0_i32_18 = arith.constant 0 : i32
    %31 = arith.cmpi ne, %30, %c0_i32_18 : i32
    scf.if %31 {
      %c0_19 = arith.constant 0 : index
      %c0_20 = arith.constant 0 : index
      %32 = vector.load %arg8[%c0_19, %c0_20] : memref<256x128xf32, #tpu.memory_space<vmem>>, vector<256x128xf32>
      %c0_21 = arith.constant 0 : index
      %c0_22 = arith.constant 0 : index
      %33 = vector.load %arg6[%c0_21, %c0_22] : memref<1x128xf32, #tpu.memory_space<vmem>>, vector<1x128xf32>
      %34 = vector.broadcast %33 : vector<1x128xf32> to vector<256x128xf32>
      %35 = arith.addf %32, %34 : vector<256x128xf32>
      %c0_23 = arith.constant 0 : index
      %c0_24 = arith.constant 0 : index
      %36 = vector.load %arg7[%c0_23, %c0_24] : memref<256x128xf32, #tpu.memory_space<vmem>>, vector<256x128xf32>
      tpu.vector_store %arg7[%c0_23, %c0_24], %35 {strides = array<i32>} : memref<256x128xf32, #tpu.memory_space<vmem>>, vector<256x128xf32>,
    } else {
    }
    return
  }
  func.func @transform_0(%arg0: i32, %arg1: i32) -> (i32, i32) {
    %c0_i32 = arith.constant 0 : i32
    %c0_i32_0 = arith.constant 0 : i32
    return %arg0, %c0_i32 : i32, i32
  }
  func.func @transform_1(%arg0: i32, %arg1: i32) -> (i32, i32) {
    %c0_i32 = arith.constant 0 : i32
    %c0_i32_0 = arith.constant 0 : i32
    return %c0_i32, %arg1 : i32, i32
  }
  func.func @transform_2(%arg0: i32, %arg1: i32) -> (i32, i32) {
    %c0_i32 = arith.constant 0 : i32
    %c0_i32_0 = arith.constant 0 : i32
    return %c0_i32, %arg1 : i32, i32
  }
  func.func @transform_3(%arg0: i32, %arg1: i32) -> (i32, i32) {
    %c0_i32 = arith.constant 0 : i32
    %c0_i32_0 = arith.constant 0 : i32
    return %arg1, %c0_i32 : i32, i32
  }
  func.func @transform_4(%arg0: i32, %arg1: i32) -> (i32, i32) {
    %c0_i32 = arith.constant 0 : i32
    %c0_i32_0 = arith.constant 0 : i32
    %c0_i32_1 = arith.constant 0 : i32
    return %c0_i32, %c0_i32_0 : i32, i32
  }
  func.func @transform_5(%arg0: i32, %arg1: i32) -> (i32, i32) {
    %c0_i32 = arith.constant 0 : i32
    %c0_i32_0 = arith.constant 0 : i32
    return %arg0, %c0_i32 : i32, i32
  }
}

</mosaic_0001>

<llo_original>
// kernel: mlp_pallas.1
$region0: #{mlp_pallas.1}
  #allocation0 [shape = 'u32[]', space=smem, size = 0x4, offset = 0x4, fixed_abs, tag = 'smem constant byte address 0x4 - core index']
  #allocation1 [shape = 'u32[144,128]{1,0:T(1,128)}', space=vmem, size = 0x12000, scoped, tag = 'internal scratch']
  #allocation2 [shape = 'f32[256,128]{1,0:T(8,128)}', space=vmem, size = 0x20000, scoped, tag = 'scratch operand']
  %s0 = inlined_call_operand.hbm [shape: f32[256,128], index: 0, kind: input, shape index: {}]
  %s1 = inlined_call_operand.hbm [shape: bf16[128,256], index: 1, kind: input, shape index: {}]
  %s2 = inlined_call_operand.vmem [shape: f32[1,256], index: 2, kind: input, shape index: {}]
  %s3 = inlined_call_operand.hbm [shape: bf16[256,128], index: 3, kind: input, shape index: {}]
  %s4 = inlined_call_operand.vmem [shape: f32[1,128], index: 4, kind: input, shape index: {}]
  %s5 = inlined_call_operand.hbm [shape: f32[256,128], index: 5, kind: output, shape index: {}]
  %s6 = sld [smem:[#allocation0]]
  $region50: #{mlp_pallas.1} parent=0
    _
  %s8 = ssub.s32 1, %s6
  %s9 = scalar_select 0, %s8, %s6
  $region1: #{mlp_pallas.1} parent=0
    #allocation3 [shape = 'u8[131072]{0}', space=vmem, size = 0x20000, scoped, tag = 'input window, operand 0, single buffered']
    #allocation4 [shape = 's32[1]{0}', space=sflag, size = 0x4, scoped, tag = 'scoped memory for mlp_pallas.1']
    #allocation5 [shape = 's32[1]{0}', space=sflag, size = 0x4, scoped, tag = 'scoped memory for mlp_pallas.1']
    #allocation6 [shape = 'u8[65536]{0}', space=vmem, size = 0x10000, scoped, tag = 'input window, operand 1, single buffered']
    #allocation7 [shape = 's32[1]{0}', space=sflag, size = 0x4, scoped, tag = 'scoped memory for mlp_pallas.1']
    #allocation8 [shape = 'u8[65536]{0}', space=vmem, size = 0x10000, scoped, tag = 'input window, operand 3, single buffered']
    #allocation9 [shape = 'u8[131072]{0}', space=vmem, size = 0x20000, scoped, tag = 'output window, operand 0, single buffered']
    %10 = vsyncpa [#allocation4], 0
    %11 = vsyncpa [#allocation7], 0
    %12 = vsyncpa [#allocation5], 0
    // Predicated region
    $region2: #{mlp_pallas.1} parent=1 // pred_check
      _
    $region3: #{mlp_pallas.1} parent=1 // pred_check_branch
      %14 = sbr.rel (0) target = $region5
    $region4: #{mlp_pallas.1} parent=1 // pred_region
      %s16 = ssub.s32 4096, 4096
      %17 = vsyncadd [#allocation4], %s16
      %s18 = sshll.u32 [#allocation3], 4
      %s19 = int_to_ptr.vmem [resolvable:$true] %s18
      %24 = dma.hbm_to_vmem [thread:$0]  %s0, 4096, %s19, [#allocation4], 128, 128, 8
    $region5: #{mlp_pallas.1} parent=1 // pred_fallthru
      _
    // Predicated region
    $region6: #{mlp_pallas.1} parent=1 // pred_check
      _
    $region7: #{mlp_pallas.1} parent=1 // pred_check_branch
      %26 = sbr.rel (0) target = $region9
    $region8: #{mlp_pallas.1} parent=1 // pred_region
      %s28 = ssub.s32 2048, 2048
      %29 = vsyncadd [#allocation7], %s28
      %s30 = sshll.u32 [#allocation6], 4
      %s31 = int_to_ptr.vmem [resolvable:$true] %s30
      %36 = dma.hbm_to_vmem [thread:$0]  %s1, 2048, %s31, [#allocation7], 128, 128, 8
    $region9: #{mlp_pallas.1} parent=1 // pred_fallthru
      _
    // Predicated region
    $region10: #{mlp_pallas.1} parent=1 // pred_check
      _
    $region11: #{mlp_pallas.1} parent=1 // pred_check_branch
      %38 = sbr.rel (0) target = $region13
    $region12: #{mlp_pallas.1} parent=1 // pred_region
      _
    $region13: #{mlp_pallas.1} parent=1 // pred_fallthru
      _
    // Predicated region
    $region14: #{mlp_pallas.1} parent=1 // pred_check
      _
    $region15: #{mlp_pallas.1} parent=1 // pred_check_branch
      %40 = sbr.rel (0) target = $region17
    $region16: #{mlp_pallas.1} parent=1 // pred_region
      %s42 = ssub.s32 2048, 2048
      %43 = vsyncadd [#allocation7], %s42
      %s44 = sshll.u32 [#allocation8], 4
      %s45 = int_to_ptr.vmem [resolvable:$true] %s44
      %50 = dma.hbm_to_vmem [thread:$0]  %s3, 2048, %s45, [#allocation7], 64, 64, 4
    $region17: #{mlp_pallas.1} parent=1 // pred_fallthru
      _
    // Predicated region
    $region18: #{mlp_pallas.1} parent=1 // pred_check
      _
    $region19: #{mlp_pallas.1} parent=1 // pred_check_branch
      %52 = sbr.rel (0) target = $region21
    $region20: #{mlp_pallas.1} parent=1 // pred_region
      _
    $region21: #{mlp_pallas.1} parent=1 // pred_fallthru
      _
    // Predicated region
    $region22: #{mlp_pallas.1} parent=1 // pred_check
      _
    $region23: #{mlp_pallas.1} parent=1 // pred_check_branch
      %54 = sbr.rel (0) target = $region25
    $region24: #{mlp_pallas.1} parent=1 // pred_region
      %55 = dma.done [#allocation4], 4096
    $region25: #{mlp_pallas.1} parent=1 // pred_fallthru
      _
    // Predicated region
    $region26: #{mlp_pallas.1} parent=1 // pred_check
      _
    $region27: #{mlp_pallas.1} parent=1 // pred_check_branch
      %57 = sbr.rel (0) target = $region29
    $region28: #{mlp_pallas.1} parent=1 // pred_region
      %58 = dma.done [#allocation7], 2048
    $region29: #{mlp_pallas.1} parent=1 // pred_fallthru
      _
    // Predicated region
    $region30: #{mlp_pallas.1} parent=1 // pred_check
      _
    $region31: #{mlp_pallas.1} parent=1 // pred_check_branch
      %60 = sbr.rel (0) target = $region33
    $region32: #{mlp_pallas.1} parent=1 // pred_region
      %61 = dma.done [#allocation7], 2048
    $region33: #{mlp_pallas.1} parent=1 // pred_fallthru
      _
    %p63 = scmp.eq.s32.totalorder 0, 0
    // Predicated region
    $region34: #{mlp_pallas.1} parent=1 // pred_check
      %p64 = pneg %p63
    $region35: #{mlp_pallas.1} parent=1 // pred_check_branch
      %66 = sbr.rel (%p64) target = $region37
    $region36: #{mlp_pallas.1} parent=1 // pred_region
      %67 = vst [vmem:[#allocation2] sm:$0xff] 0.0
      %68 = vst [vmem:[#allocation2 + $0x8] sm:$0xff] 0.0
      %69 = vst [vmem:[#allocation2 + $0x10] sm:$0xff] 0.0
      %70 = vst [vmem:[#allocation2 + $0x18] sm:$0xff] 0.0
      %71 = vst [vmem:[#allocation2 + $0x20] sm:$0xff] 0.0
      %72 = vst [vmem:[#allocation2 + $0x28] sm:$0xff] 0.0
      %73 = vst [vmem:[#allocation2 + $0x30] sm:$0xff] 0.0
      %74 = vst [vmem:[#allocation2 + $0x38] sm:$0xff] 0.0
      %75 = vst [vmem:[#allocation2 + $0x40] sm:$0xff] 0.0
      %76 = vst [vmem:[#allocation2 + $0x48] sm:$0xff] 0.0
      %77 = vst [vmem:[#allocation2 + $0x50] sm:$0xff] 0.0
      %78 = vst [vmem:[#allocation2 + $0x58] sm:$0xff] 0.0
      %79 = vst [vmem:[#allocation2 + $0x60] sm:$0xff] 0.0
      %80 = vst [vmem:[#allocation2 + $0x68] sm:$0xff] 0.0
      %81 = vst [vmem:[#allocation2 + $0x70] sm:$0xff] 0.0
      %82 = vst [vmem:[#allocation2 + $0x78] sm:$0xff] 0.0
      %83 = vst [vmem:[#allocation2 + $0x80] sm:$0xff] 0.0
      %84 = vst [vmem:[#allocation2 + $0x88] sm:$0xff] 0.0
      %85 = vst [vmem:[#allocation2 + $0x90] sm:$0xff] 0.0
      %86 = vst [vmem:[#allocation2 + $0x98] sm:$0xff] 0.0
      %87 = vst [vmem:[#allocation2 + $0xa0] sm:$0xff] 0.0
      %88 = vst [vmem:[#allocation2 + $0xa8] sm:$0xff] 0.0
      %89 = vst [vmem:[#allocation2 + $0xb0] sm:$0xff] 0.0
      %90 = vst [vmem:[#allocation2 + $0xb8] sm:$0xff] 0.0
      %91 = vst [vmem:[#allocation2 + $0xc0] sm:$0xff] 0.0
      %92 = vst [vmem:[#allocation2 + $0xc8] sm:$0xff] 0.0
      %93 = vst [vmem:[#allocation2 + $0xd0] sm:$0xff] 0.0
      %94 = vst [vmem:[#allocation2 + $0xd8] sm:$0xff] 0.0
      %95 = vst [vmem:[#allocation2 + $0xe0] sm:$0xff] 0.0
      %96 = vst [vmem:[#allocation2 + $0xe8] sm:$0xff] 0.0
      %97 = vst [vmem:[#allocation2 + $0xf0] sm:$0xff] 0.0
      %98 = vst [vmem:[#allocation2 + $0xf8] sm:$0xff] 0.0
    $region37: #{mlp_pallas.1} parent=1 // pred_fallthru
      _
    %v99 = vld [vmem:[#allocation3] sm:$0xff]
    %v100 = vld [vmem:[#allocation3 + $0x8] sm:$0xff]
    %v101 = vld [vmem:[#allocation3 + $0x10] sm:$0xff]
    %v102 = vld [vmem:[#allocation3 + $0x18] sm:$0xff]
    %v103 = vld [vmem:[#allocation3 + $0x20] sm:$0xff]
    %v104 = vld [vmem:[#allocation3 + $0x28] sm:$0xff]
    %v105 = vld [vmem:[#allocation3 + $0x30] sm:$0xff]
    %v106 = vld [vmem:[#allocation3 + $0x38] sm:$0xff]
    %v107 = vld [vmem:[#allocation3 + $0x40] sm:$0xff]
    %v108 = vld [vmem:[#allocation3 + $0x48] sm:$0xff]
    %v109 = vld [vmem:[#allocation3 + $0x50] sm:$0xff]
    %v110 = vld [vmem:[#allocation3 + $0x58] sm:$0xff]
    %v111 = vld [vmem:[#allocation3 + $0x60] sm:$0xff]
    %v112 = vld [vmem:[#allocation3 + $0x68] sm:$0xff]
    %v113 = vld [vmem:[#allocation3 + $0x70] sm:$0xff]
    %v114 = vld [vmem:[#allocation3 + $0x78] sm:$0xff]
    %v115 = vld [vmem:[#allocation3 + $0x80] sm:$0xff]
    %v116 = vld [vmem:[#allocation3 + $0x88] sm:$0xff]
    %v117 = vld [vmem:[#allocation3 + $0x90] sm:$0xff]
    %v118 = vld [vmem:[#allocation3 + $0x98] sm:$0xff]
    %v119 = vld [vmem:[#allocation3 + $0xa0] sm:$0xff]
    %v120 = vld [vmem:[#allocation3 + $0xa8] sm:$0xff]
    %v121 = vld [vmem:[#allocation3 + $0xb0] sm:$0xff]
    %v122 = vld [vmem:[#allocation3 + $0xb8] sm:$0xff]
    %v123 = vld [vmem:[#allocation3 + $0xc0] sm:$0xff]
    %v124 = vld [vmem:[#allocation3 + $0xc8] sm:$0xff]
    %v125 = vld [vmem:[#allocation3 + $0xd0] sm:$0xff]
    %v126 = vld [vmem:[#allocation3 + $0xd8] sm:$0xff]
    %v127 = vld [vmem:[#allocation3 + $0xe0] sm:$0xff]
    %v128 = vld [vmem:[#allocation3 + $0xe8] sm:$0xff]
    %v129 = vld [vmem:[#allocation3 + $0xf0] sm:$0xff]
    %v130 = vld [vmem:[#allocation3 + $0xf8] sm:$0xff]
    %v131 = vpack.c.bf16 %v100, %v99
    %v132 = vpack.c.bf16 %v102, %v101
    %v133 = vpack.c.bf16 %v104, %v103
    %v134 = vpack.c.bf16 %v106, %v105
    %v135 = vpack.c.bf16 %v108, %v107
    %v136 = vpack.c.bf16 %v110, %v109
    %v137 = vpack.c.bf16 %v112, %v111
    %v138 = vpack.c.bf16 %v114, %v113
    %v139 = vpack.c.bf16 %v116, %v115
    %v140 = vpack.c.bf16 %v118, %v117
    %v141 = vpack.c.bf16 %v120, %v119
    %v142 = vpack.c.bf16 %v122, %v121
    %v143 = vpack.c.bf16 %v124, %v123
    %v144 = vpack.c.bf16 %v126, %v125
    %v145 = vpack.c.bf16 %v128, %v127
    %v146 = vpack.c.bf16 %v130, %v129
    %v147 = vld [vmem:[#allocation6] sm:$0xff]
    %v148 = vld [vmem:[#allocation6 + $0x8] sm:$0xff]
    %v149 = vld [vmem:[#allocation6 + $0x10] sm:$0xff]
    %v150 = vld [vmem:[#allocation6 + $0x18] sm:$0xff]
    %v151 = vld [vmem:[#allocation6 + $0x20] sm:$0xff]
    %v152 = vld [vmem:[#allocation6 + $0x28] sm:$0xff]
    %v153 = vld [vmem:[#allocation6 + $0x30] sm:$0xff]
    %v154 = vld [vmem:[#allocation6 + $0x38] sm:$0xff]
    %v155 = vld [vmem:[#allocation6 + $0x40] sm:$0xff]
    %v156 = vld [vmem:[#allocation6 + $0x48] sm:$0xff]
    %v157 = vld [vmem:[#allocation6 + $0x50] sm:$0xff]
    %v158 = vld [vmem:[#allocation6 + $0x58] sm:$0xff]
    %v159 = vld [vmem:[#allocation6 + $0x60] sm:$0xff]
    %v160 = vld [vmem:[#allocation6 + $0x68] sm:$0xff]
    %v161 = vld [vmem:[#allocation6 + $0x70] sm:$0xff]
    %v162 = vld [vmem:[#allocation6 + $0x78] sm:$0xff]
    %v163 = vld [vmem:[%s2] sm:$0x3]
    %v165 = vlaneseq
    %v166 = vshrl.u32 %v165, 7
    %v167 = vsub.s32 0, %v166
    %v168 = vrot.slane %v163, %v167
    %v169 = vlaneseq
    %v170 = vshrl.u32 %v169, 7
    %v171 = vsub.s32 1, %v170
    %v172 = vrot.slane %v163, %v171
    %v191 = vunpack.c.l.b16 %v147
    %v192 = vunpack.c.h.b16 %v147
    %v193 = vunpack.c.l.b16 %v148
    %v194 = vunpack.c.h.b16 %v148
    %v195 = vunpack.c.l.b16 %v149
    %v196 = vunpack.c.h.b16 %v149
    %v197 = vunpack.c.l.b16 %v150
    %v198 = vunpack.c.h.b16 %v150
    %v199 = vunpack.c.l.b16 %v151
    %v200 = vunpack.c.h.b16 %v151
    %v201 = vunpack.c.l.b16 %v152
    %v202 = vunpack.c.h.b16 %v152
    %v203 = vunpack.c.l.b16 %v153
    %v204 = vunpack.c.h.b16 %v153
    %v205 = vunpack.c.l.b16 %v154
    %v206 = vunpack.c.h.b16 %v154
    %v207 = vunpack.c.l.b16 %v155
    %v208 = vunpack.c.h.b16 %v155
    %v209 = vunpack.c.l.b16 %v156
    %v210 = vunpack.c.h.b16 %v156
    %v211 = vunpack.c.l.b16 %v157
    %v212 = vunpack.c.h.b16 %v157
    %v213 = vunpack.c.l.b16 %v158
    %v214 = vunpack.c.h.b16 %v158
    %v215 = vunpack.c.l.b16 %v159
    %v216 = vunpack.c.h.b16 %v159
    %v217 = vunpack.c.l.b16 %v160
    %v218 = vunpack.c.h.b16 %v160
    %v219 = vunpack.c.l.b16 %v161
    %v220 = vunpack.c.h.b16 %v161
    %v221 = vunpack.c.l.b16 %v162
    %v222 = vunpack.c.h.b16 %v162
    %v223 = vpack.c.b16 %v193, %v191
    %v224 = vpack.c.b16 %v194, %v192
    %v225 = vpack.c.b16 %v197, %v195
    %v226 = vpack.c.b16 %v198, %v196
    %v227 = vpack.c.b16 %v201, %v199
    %v228 = vpack.c.b16 %v202, %v200
    %v229 = vpack.c.b16 %v205, %v203
    %v230 = vpack.c.b16 %v206, %v204
    %v231 = vpack.c.b16 %v209, %v207
    %v232 = vpack.c.b16 %v210, %v208
    %v233 = vpack.c.b16 %v213, %v211
    %v234 = vpack.c.b16 %v214, %v212
    %v235 = vpack.c.b16 %v217, %v215
    %v236 = vpack.c.b16 %v218, %v216
    %v237 = vpack.c.b16 %v221, %v219
    %v238 = vpack.c.b16 %v222, %v220
    %255 = vmatprep.subr.bf16.mxu0 %v224
    %256 = vmatpush1.bf16.msra.mxu0 %v223
    %257 = vmatprep.subr.bf16.mxu0 %v226
    %258 = vmatpush1.bf16.msra.mxu0 %v225
    %259 = vmatprep.subr.bf16.mxu0 %v228
    %260 = vmatpush1.bf16.msra.mxu0 %v227
    %261 = vmatprep.subr.bf16.mxu0 %v230
    %262 = vmatpush1.bf16.msra.mxu0 %v229
    %263 = vmatprep.subr.bf16.mxu0 %v232
    %264 = vmatpush1.bf16.msra.mxu0 %v231
    %265 = vmatprep.subr.bf16.mxu0 %v234
    %266 = vmatpush1.bf16.msra.mxu0 %v233
    %267 = vmatprep.subr.bf16.mxu0 %v236
    %268 = vmatpush1.bf16.msra.mxu0 %v235
    %269 = vmatprep.subr.bf16.mxu0 %v238
    %270 = vmatpush1.bf16.msra.mxu0 %v237
    %271 = vmatprep.subr.bf16.mxu0 0
    %272 = vmatpush1.bf16.msra.mxu0 0
    %273 = vmatprep.subr.bf16.mxu0 0
    %274 = vmatpush1.bf16.msra.mxu0 0
    %275 = vmatprep.subr.bf16.mxu0 0
    %276 = vmatpush1.bf16.msra.mxu0 0
    %277 = vmatprep.subr.bf16.mxu0 0
    %278 = vmatpush1.bf16.msra.mxu0 0
    %279 = vmatprep.subr.bf16.mxu0 0
    %280 = vmatpush1.bf16.msra.mxu0 0
    %281 = vmatprep.subr.bf16.mxu0 0
    %282 = vmatpush1.bf16.msra.mxu0 0
    %283 = vmatprep.subr.bf16.mxu0 0
    %284 = vmatpush1.bf16.msra.mxu0 0
    %285 = vmatprep.subr.bf16.mxu0 0
    %286 = vmatpush1.bf16.msra.mxu0 0
    %287 = vmatprep.mubr.bf16.mxu0 0
    %288 = vmatmul.mubr.bf16.gmra.mrb[0].mxu0 %v131
    %v289 = vpop.f32.mrb[0].mxu0
    %v290 = vadd.f32 %v168, %v289
    %v291 = vpop.f32.mrb[0].mxu0
    %v292 = vadd.f32 %v172, %v291
    %v293 = vpop.f32.mrb[0].mxu0
    %v294 = vadd.f32 %v168, %v293
    %v295 = vpop.f32.mrb[0].mxu0
    %v296 = vadd.f32 %v172, %v295
    %297 = vmatprep.mubr.bf16.mxu0 0
    %298 = vmatmul.mubr.bf16.gmra.mrb[0].mxu0 %v132
    %v299 = vpop.f32.mrb[0].mxu0
    %v300 = vadd.f32 %v168, %v299
    %v301 = vpop.f32.mrb[0].mxu0
    %v302 = vadd.f32 %v172, %v301
    %v303 = vpop.f32.mrb[0].mxu0
    %v304 = vadd.f32 %v168, %v303
    %v305 = vpop.f32.mrb[0].mxu0
    %v306 = vadd.f32 %v172, %v305
    %307 = vmatprep.mubr.bf16.mxu0 0
    %308 = vmatmul.mubr.bf16.gmra.mrb[0].mxu0 %v133
    %v309 = vpop.f32.mrb[0].mxu0
    %v310 = vadd.f32 %v168, %v309
    %v311 = vpop.f32.mrb[0].mxu0
    %v312 = vadd.f32 %v172, %v311
    %v313 = vpop.f32.mrb[0].mxu0
    %v314 = vadd.f32 %v168, %v313
    %v315 = vpop.f32.mrb[0].mxu0
    %v316 = vadd.f32 %v172, %v315
    %317 = vmatprep.mubr.bf16.mxu0 0
    %318 = vmatmul.mubr.bf16.gmra.mrb[0].mxu0 %v134
    %v319 = vpop.f32.mrb[0].mxu0
    %v320 = vadd.f32 %v168, %v319
    %v321 = vpop.f32.mrb[0].mxu0
    %v322 = vadd.f32 %v172, %v321
    %v323 = vpop.f32.mrb[0].mxu0
    %v324 = vadd.f32 %v168, %v323
    %v325 = vpop.f32.mrb[0].mxu0
    %v326 = vadd.f32 %v172, %v325
    %327 = vmatprep.mubr.bf16.mxu0 0
    %328 = vmatmul.mubr.bf16.gmra.mrb[0].mxu0 %v135
    %v329 = vpop.f32.mrb[0].mxu0
    %v330 = vadd.f32 %v168, %v329
    %v331 = vpop.f32.mrb[0].mxu0
    %v332 = vadd.f32 %v172, %v331
    %v333 = vpop.f32.mrb[0].mxu0
    %v334 = vadd.f32 %v168, %v333
    %v335 = vpop.f32.mrb[0].mxu0
    %v336 = vadd.f32 %v172, %v335
    %337 = vmatprep.mubr.bf16.mxu0 0
    %338 = vmatmul.mubr.bf16.gmra.mrb[0].mxu0 %v136
    %v339 = vpop.f32.mrb[0].mxu0
    %v340 = vadd.f32 %v168, %v339
    %v341 = vpop.f32.mrb[0].mxu0
    %v342 = vadd.f32 %v172, %v341
    %v343 = vpop.f32.mrb[0].mxu0
    %v344 = vadd.f32 %v168, %v343
    %v345 = vpop.f32.mrb[0].mxu0
    %v346 = vadd.f32 %v172, %v345
    %347 = vmatprep.mubr.bf16.mxu0 0
    %348 = vmatmul.mubr.bf16.gmra.mrb[0].mxu0 %v137
    %v349 = vpop.f32.mrb[0].mxu0
    %v350 = vadd.f32 %v168, %v349
    %v351 = vpop.f32.mrb[0].mxu0
    %v352 = vadd.f32 %v172, %v351
    %v353 = vpop.f32.mrb[0].mxu0
    %v354 = vadd.f32 %v168, %v353
    %v355 = vpop.f32.mrb[0].mxu0
    %v356 = vadd.f32 %v172, %v355
    %357 = vmatprep.mubr.bf16.mxu0 0
    %358 = vmatmul.mubr.bf16.gmra.mrb[0].mxu0 %v138
    %v359 = vpop.f32.mrb[0].mxu0
    %v360 = vadd.f32 %v168, %v359
    %v361 = vpop.f32.mrb[0].mxu0
    %v362 = vadd.f32 %v172, %v361
    %v363 = vpop.f32.mrb[0].mxu0
    %v364 = vadd.f32 %v168, %v363
    %v365 = vpop.f32.mrb[0].mxu0
    %v366 = vadd.f32 %v172, %v365
    %367 = vmatprep.mubr.bf16.mxu0 0
    %368 = vmatmul.mubr.bf16.gmra.mrb[0].mxu0 %v139
    %v369 = vpop.f32.mrb[0].mxu0
    %v370 = vadd.f32 %v168, %v369
    %v371 = vpop.f32.mrb[0].mxu0
    %v372 = vadd.f32 %v172, %v371
    %v373 = vpop.f32.mrb[0].mxu0
    %v374 = vadd.f32 %v168, %v373
    %v375 = vpop.f32.mrb[0].mxu0
    %v376 = vadd.f32 %v172, %v375
    %377 = vmatprep.mubr.bf16.mxu0 0
    %378 = vmatmul.mubr.bf16.gmra.mrb[0].mxu0 %v140
    %v379 = vpop.f32.mrb[0].mxu0
    %v380 = vadd.f32 %v168, %v379
    %v381 = vpop.f32.mrb[0].mxu0
    %v382 = vadd.f32 %v172, %v381
    %v383 = vpop.f32.mrb[0].mxu0
    %v384 = vadd.f32 %v168, %v383
    %v385 = vpop.f32.mrb[0].mxu0
    %v386 = vadd.f32 %v172, %v385
    %387 = vmatprep.mubr.bf16.mxu0 0
    %388 = vmatmul.mubr.bf16.gmra.mrb[0].mxu0 %v141
    %v389 = vpop.f32.mrb[0].mxu0
    %v390 = vadd.f32 %v168, %v389
    %v391 = vpop.f32.mrb[0].mxu0
    %v392 = vadd.f32 %v172, %v391
    %v393 = vpop.f32.mrb[0].mxu0
    %v394 = vadd.f32 %v168, %v393
    %v395 = vpop.f32.mrb[0].mxu0
    %v396 = vadd.f32 %v172, %v395
    %397 = vmatprep.mubr.bf16.mxu0 0
    %398 = vmatmul.mubr.bf16.gmra.mrb[0].mxu0 %v142
    %v399 = vpop.f32.mrb[0].mxu0
    %v400 = vadd.f32 %v168, %v399
    %v401 = vpop.f32.mrb[0].mxu0
    %v402 = vadd.f32 %v172, %v401
    %v403 = vpop.f32.mrb[0].mxu0
    %v404 = vadd.f32 %v168, %v403
    %v405 = vpop.f32.mrb[0].mxu0
    %v406 = vadd.f32 %v172, %v405
    %407 = vmatprep.mubr.bf16.mxu0 0
    %408 = vmatmul.mubr.bf16.gmra.mrb[0].mxu0 %v143
    %v409 = vpop.f32.mrb[0].mxu0
    %v410 = vadd.f32 %v168, %v409
    %v411 = vpop.f32.mrb[0].mxu0
    %v412 = vadd.f32 %v172, %v411
    %v413 = vpop.f32.mrb[0].mxu0
    %v414 = vadd.f32 %v168, %v413
    %v415 = vpop.f32.mrb[0].mxu0
    %v416 = vadd.f32 %v172, %v415
    %417 = vmatprep.mubr.bf16.mxu0 0
    %418 = vmatmul.mubr.bf16.gmra.mrb[0].mxu0 %v144
    %v419 = vpop.f32.mrb[0].mxu0
    %v420 = vadd.f32 %v168, %v419
    %v421 = vpop.f32.mrb[0].mxu0
    %v422 = vadd.f32 %v172, %v421
    %v423 = vpop.f32.mrb[0].mxu0
    %v424 = vadd.f32 %v168, %v423
    %v425 = vpop.f32.mrb[0].mxu0
    %v426 = vadd.f32 %v172, %v425
    %427 = vmatprep.mubr.bf16.mxu0 0
    %428 = vmatmul.mubr.bf16.gmra.mrb[0].mxu0 %v145
    %v429 = vpop.f32.mrb[0].mxu0
    %v430 = vadd.f32 %v168, %v429
    %v431 = vpop.f32.mrb[0].mxu0
    %v432 = vadd.f32 %v172, %v431
    %v433 = vpop.f32.mrb[0].mxu0
    %v434 = vadd.f32 %v168, %v433
    %v435 = vpop.f32.mrb[0].mxu0
    %v436 = vadd.f32 %v172, %v435
    %437 = vmatprep.mubr.bf16.mxu0 0
    %438 = vmatmul.mubr.bf16.gmra.mrb[0].mxu0 %v146
    %v439 = vpop.f32.mrb[0].mxu0
    %v440 = vadd.f32 %v168, %v439
    %v441 = vpop.f32.mrb[0].mxu0
    %v442 = vadd.f32 %v172, %v441
    %v443 = vpop.f32.mrb[0].mxu0
    %v444 = vadd.f32 %v168, %v443
    %v445 = vpop.f32.mrb[0].mxu0
    %v446 = vadd.f32 %v172, %v445
    %447 = vdwg.mxu0
    %v448 = vmul.f32 %v290, %v290
    %v449 = vmul.f32 %v292, %v292
    %v450 = vmul.f32 %v294, %v294
    %v451 = vmul.f32 %v296, %v296
    %v452 = vmul.f32 %v300, %v300
    %v453 = vmul.f32 %v302, %v302
    %v454 = vmul.f32 %v304, %v304
    %v455 = vmul.f32 %v306, %v306
    %v456 = vmul.f32 %v310, %v310
    %v457 = vmul.f32 %v312, %v312
    %v458 = vmul.f32 %v314, %v314
    %v459 = vmul.f32 %v316, %v316
    %v460 = vmul.f32 %v320, %v320
    %v461 = vmul.f32 %v322, %v322
    %v462 = vmul.f32 %v324, %v324
    %v463 = vmul.f32 %v326, %v326
    %v464 = vmul.f32 %v330, %v330
    %v465 = vmul.f32 %v332, %v332
    %v466 = vmul.f32 %v334, %v334
    %v467 = vmul.f32 %v336, %v336
    %v468 = vmul.f32 %v340, %v340
    %v469 = vmul.f32 %v342, %v342
    %v470 = vmul.f32 %v344, %v344
    %v471 = vmul.f32 %v346, %v346
    %v472 = vmul.f32 %v350, %v350
    %v473 = vmul.f32 %v352, %v352
    %v474 = vmul.f32 %v354, %v354
    %v475 = vmul.f32 %v356, %v356
    %v476 = vmul.f32 %v360, %v360
    %v477 = vmul.f32 %v362, %v362
    %v478 = vmul.f32 %v364, %v364
    %v479 = vmul.f32 %v366, %v366
    %v480 = vmul.f32 %v370, %v370
    %v481 = vmul.f32 %v372, %v372
    %v482 = vmul.f32 %v374, %v374
    %v483 = vmul.f32 %v376, %v376
    %v484 = vmul.f32 %v380, %v380
    %v485 = vmul.f32 %v382, %v382
    %v486 = vmul.f32 %v384, %v384
    %v487 = vmul.f32 %v386, %v386
    %v488 = vmul.f32 %v390, %v390
    %v489 = vmul.f32 %v392, %v392
    %v490 = vmul.f32 %v394, %v394
    %v491 = vmul.f32 %v396, %v396
    %v492 = vmul.f32 %v400, %v400
    %v493 = vmul.f32 %v402, %v402
    %v494 = vmul.f32 %v404, %v404
    %v495 = vmul.f32 %v406, %v406
    %v496 = vmul.f32 %v410, %v410
    %v497 = vmul.f32 %v412, %v412
    %v498 = vmul.f32 %v414, %v414
    %v499 = vmul.f32 %v416, %v416
    %v500 = vmul.f32 %v420, %v420
    %v501 = vmul.f32 %v422, %v422
    %v502 = vmul.f32 %v424, %v424
    %v503 = vmul.f32 %v426, %v426
    %v504 = vmul.f32 %v430, %v430
    %v505 = vmul.f32 %v432, %v432
    %v506 = vmul.f32 %v434, %v434
    %v507 = vmul.f32 %v436, %v436
    %v508 = vmul.f32 %v440, %v440
    %v509 = vmul.f32 %v442, %v442
    %v510 = vmul.f32 %v444, %v444
    %v511 = vmul.f32 %v446, %v446
    %v512 = vmul.f32 %v290, %v448
    %v513 = vmul.f32 %v292, %v449
    %v514 = vmul.f32 %v294, %v450
    %v515 = vmul.f32 %v296, %v451
    %v516 = vmul.f32 %v300, %v452
    %v517 = vmul.f32 %v302, %v453
    %v518 = vmul.f32 %v304, %v454
    %v519 = vmul.f32 %v306, %v455
    %v520 = vmul.f32 %v310, %v456
    %v521 = vmul.f32 %v312, %v457
    %v522 = vmul.f32 %v314, %v458
    %v523 = vmul.f32 %v316, %v459
    %v524 = vmul.f32 %v320, %v460
    %v525 = vmul.f32 %v322, %v461
    %v526 = vmul.f32 %v324, %v462
    %v527 = vmul.f32 %v326, %v463
    %v528 = vmul.f32 %v330, %v464
    %v529 = vmul.f32 %v332, %v465
    %v530 = vmul.f32 %v334, %v466
    %v531 = vmul.f32 %v336, %v467
    %v532 = vmul.f32 %v340, %v468
    %v533 = vmul.f32 %v342, %v469
    %v534 = vmul.f32 %v344, %v470
    %v535 = vmul.f32 %v346, %v471
    %v536 = vmul.f32 %v350, %v472
    %v537 = vmul.f32 %v352, %v473
    %v538 = vmul.f32 %v354, %v474
    %v539 = vmul.f32 %v356, %v475
    %v540 = vmul.f32 %v360, %v476
    %v541 = vmul.f32 %v362, %v477
    %v542 = vmul.f32 %v364, %v478
    %v543 = vmul.f32 %v366, %v479
    %v544 = vmul.f32 %v370, %v480
    %v545 = vmul.f32 %v372, %v481
    %v546 = vmul.f32 %v374, %v482
    %v547 = vmul.f32 %v376, %v483
    %v548 = vmul.f32 %v380, %v484
    %v549 = vmul.f32 %v382, %v485
    %v550 = vmul.f32 %v384, %v486
    %v551 = vmul.f32 %v386, %v487
    %v552 = vmul.f32 %v390, %v488
    %v553 = vmul.f32 %v392, %v489
    %v554 = vmul.f32 %v394, %v490
    %v555 = vmul.f32 %v396, %v491
    %v556 = vmul.f32 %v400, %v492
    %v557 = vmul.f32 %v402, %v493
    %v558 = vmul.f32 %v404, %v494
    %v559 = vmul.f32 %v406, %v495
    %v560 = vmul.f32 %v410, %v496
    %v561 = vmul.f32 %v412, %v497
    %v562 = vmul.f32 %v414, %v498
    %v563 = vmul.f32 %v416, %v499
    %v564 = vmul.f32 %v420, %v500
    %v565 = vmul.f32 %v422, %v501
    %v566 = vmul.f32 %v424, %v502
    %v567 = vmul.f32 %v426, %v503
    %v568 = vmul.f32 %v430, %v504
    %v569 = vmul.f32 %v432, %v505
    %v570 = vmul.f32 %v434, %v506
    %v571 = vmul.f32 %v436, %v507
    %v572 = vmul.f32 %v440, %v508
    %v573 = vmul.f32 %v442, %v509
    %v574 = vmul.f32 %v444, %v510
    %v575 = vmul.f32 %v446, %v511
    %v576 = vmul.f32 %v512, 0.044715
    %v577 = vmul.f32 %v513, 0.044715
    %v578 = vmul.f32 %v514, 0.044715
    %v579 = vmul.f32 %v515, 0.044715
    %v580 = vmul.f32 %v516, 0.044715
    %v581 = vmul.f32 %v517, 0.044715
    %v582 = vmul.f32 %v518, 0.044715
    %v583 = vmul.f32 %v519, 0.044715
    %v584 = vmul.f32 %v520, 0.044715
    %v585 = vmul.f32 %v521, 0.044715
    %v586 = vmul.f32 %v522, 0.044715
    %v587 = vmul.f32 %v523, 0.044715
    %v588 = vmul.f32 %v524, 0.044715
    %v589 = vmul.f32 %v525, 0.044715
    %v590 = vmul.f32 %v526, 0.044715
    %v591 = vmul.f32 %v527, 0.044715
    %v592 = vmul.f32 %v528, 0.044715
    %v593 = vmul.f32 %v529, 0.044715
    %v594 = vmul.f32 %v530, 0.044715
    %v595 = vmul.f32 %v531, 0.044715
    %v596 = vmul.f32 %v532, 0.044715
    %v597 = vmul.f32 %v533, 0.044715
    %v598 = vmul.f32 %v534, 0.044715
    %v599 = vmul.f32 %v535, 0.044715
    %v600 = vmul.f32 %v536, 0.044715
    %v601 = vmul.f32 %v537, 0.044715
    %v602 = vmul.f32 %v538, 0.044715
    %v603 = vmul.f32 %v539, 0.044715
    %v604 = vmul.f32 %v540, 0.044715
    %v605 = vmul.f32 %v541, 0.044715
    %v606 = vmul.f32 %v542, 0.044715
    %v607 = vmul.f32 %v543, 0.044715
    %v608 = vmul.f32 %v544, 0.044715
    %v609 = vmul.f32 %v545, 0.044715
    %v610 = vmul.f32 %v546, 0.044715
    %v611 = vmul.f32 %v547, 0.044715
    %v612 = vmul.f32 %v548, 0.044715
    %v613 = vmul.f32 %v549, 0.044715
    %v614 = vmul.f32 %v550, 0.044715
    %v615 = vmul.f32 %v551, 0.044715
    %v616 = vmul.f32 %v552, 0.044715
    %v617 = vmul.f32 %v553, 0.044715
    %v618 = vmul.f32 %v554, 0.044715
    %v619 = vmul.f32 %v555, 0.044715
    %v620 = vmul.f32 %v556, 0.044715
    %v621 = vmul.f32 %v557, 0.044715
    %v622 = vmul.f32 %v558, 0.044715
    %v623 = vmul.f32 %v559, 0.044715
    %v624 = vmul.f32 %v560, 0.044715
    %v625 = vmul.f32 %v561, 0.044715
    %v626 = vmul.f32 %v562, 0.044715
    %v627 = vmul.f32 %v563, 0.044715
    %v628 = vmul.f32 %v564, 0.044715
    %v629 = vmul.f32 %v565, 0.044715
    %v630 = vmul.f32 %v566, 0.044715
    %v631 = vmul.f32 %v567, 0.044715
    %v632 = vmul.f32 %v568, 0.044715
    %v633 = vmul.f32 %v569, 0.044715
    %v634 = vmul.f32 %v570, 0.044715
    %v635 = vmul.f32 %v571, 0.044715
    %v636 = vmul.f32 %v572, 0.044715
    %v637 = vmul.f32 %v573, 0.044715
    %v638 = vmul.f32 %v574, 0.044715
    %v639 = vmul.f32 %v575, 0.044715
    %v640 = vadd.f32 %v290, %v576
    %v641 = vadd.f32 %v292, %v577
    %v642 = vadd.f32 %v294, %v578
    %v643 = vadd.f32 %v296, %v579
    %v644 = vadd.f32 %v300, %v580
    %v645 = vadd.f32 %v302, %v581
    %v646 = vadd.f32 %v304, %v582
    %v647 = vadd.f32 %v306, %v583
    %v648 = vadd.f32 %v310, %v584
    %v649 = vadd.f32 %v312, %v585
    %v650 = vadd.f32 %v314, %v586
    %v651 = vadd.f32 %v316, %v587
    %v652 = vadd.f32 %v320, %v588
    %v653 = vadd.f32 %v322, %v589
    %v654 = vadd.f32 %v324, %v590
    %v655 = vadd.f32 %v326, %v591
    %v656 = vadd.f32 %v330, %v592
    %v657 = vadd.f32 %v332, %v593
    %v658 = vadd.f32 %v334, %v594
    %v659 = vadd.f32 %v336, %v595
    %v660 = vadd.f32 %v340, %v596
    %v661 = vadd.f32 %v342, %v597
    %v662 = vadd.f32 %v344, %v598
    %v663 = vadd.f32 %v346, %v599
    %v664 = vadd.f32 %v350, %v600
    %v665 = vadd.f32 %v352, %v601
    %v666 = vadd.f32 %v354, %v602
    %v667 = vadd.f32 %v356, %v603
    %v668 = vadd.f32 %v360, %v604
    %v669 = vadd.f32 %v362, %v605
    %v670 = vadd.f32 %v364, %v606
    %v671 = vadd.f32 %v366, %v607
    %v672 = vadd.f32 %v370, %v608
    %v673 = vadd.f32 %v372, %v609
    %v674 = vadd.f32 %v374, %v610
    %v675 = vadd.f32 %v376, %v611
    %v676 = vadd.f32 %v380, %v612
    %v677 = vadd.f32 %v382, %v613
    %v678 = vadd.f32 %v384, %v614
    %v679 = vadd.f32 %v386, %v615
    %v680 = vadd.f32 %v390, %v616
    %v681 = vadd.f32 %v392, %v617
    %v682 = vadd.f32 %v394, %v618
    %v683 = vadd.f32 %v396, %v619
    %v684 = vadd.f32 %v400, %v620
    %v685 = vadd.f32 %v402, %v621
    %v686 = vadd.f32 %v404, %v622
    %v687 = vadd.f32 %v406, %v623
    %v688 = vadd.f32 %v410, %v624
    %v689 = vadd.f32 %v412, %v625
    %v690 = vadd.f32 %v414, %v626
    %v691 = vadd.f32 %v416, %v627
    %v692 = vadd.f32 %v420, %v628
    %v693 = vadd.f32 %v422, %v629
    %v694 = vadd.f32 %v424, %v630
    %v695 = vadd.f32 %v426, %v631
    %v696 = vadd.f32 %v430, %v632
    %v697 = vadd.f32 %v432, %v633
    %v698 = vadd.f32 %v434, %v634
    %v699 = vadd.f32 %v436, %v635
    %v700 = vadd.f32 %v440, %v636
    %v701 = vadd.f32 %v442, %v637
    %v702 = vadd.f32 %v444, %v638
    %v703 = vadd.f32 %v446, %v639
    %v704 = vmul.f32 %v640, 0.7978846
    %v705 = vmul.f32 %v641, 0.7978846
    %v706 = vmul.f32 %v642, 0.7978846
    %v707 = vmul.f32 %v643, 0.7978846
    %v708 = vmul.f32 %v644, 0.7978846
    %v709 = vmul.f32 %v645, 0.7978846
    %v710 = vmul.f32 %v646, 0.7978846
    %v711 = vmul.f32 %v647, 0.7978846
    %v712 = vmul.f32 %v648, 0.7978846
    %v713 = vmul.f32 %v649, 0.7978846
    %v714 = vmul.f32 %v650, 0.7978846
    %v715 = vmul.f32 %v651, 0.7978846
    %v716 = vmul.f32 %v652, 0.7978846
    %v717 = vmul.f32 %v653, 0.7978846
    %v718 = vmul.f32 %v654, 0.7978846
    %v719 = vmul.f32 %v655, 0.7978846
    %v720 = vmul.f32 %v656, 0.7978846
    %v721 = vmul.f32 %v657, 0.7978846
    %v722 = vmul.f32 %v658, 0.7978846
    %v723 = vmul.f32 %v659, 0.7978846
    %v724 = vmul.f32 %v660, 0.7978846
    %v725 = vmul.f32 %v661, 0.7978846
    %v726 = vmul.f32 %v662, 0.7978846
    %v727 = vmul.f32 %v663, 0.7978846
    %v728 = vmul.f32 %v664, 0.7978846
    %v729 = vmul.f32 %v665, 0.7978846
    %v730 = vmul.f32 %v666, 0.7978846
    %v731 = vmul.f32 %v667, 0.7978846
    %v732 = vmul.f32 %v668, 0.7978846
    %v733 = vmul.f32 %v669, 0.7978846
    %v734 = vmul.f32 %v670, 0.7978846
    %v735 = vmul.f32 %v671, 0.7978846
    %v736 = vmul.f32 %v672, 0.7978846
    %v737 = vmul.f32 %v673, 0.7978846
    %v738 = vmul.f32 %v674, 0.7978846
    %v739 = vmul.f32 %v675, 0.7978846
    %v740 = vmul.f32 %v676, 0.7978846
    %v741 = vmul.f32 %v677, 0.7978846
    %v742 = vmul.f32 %v678, 0.7978846
    %v743 = vmul.f32 %v679, 0.7978846
    %v744 = vmul.f32 %v680, 0.7978846
    %v745 = vmul.f32 %v681, 0.7978846
    %v746 = vmul.f32 %v682, 0.7978846
    %v747 = vmul.f32 %v683, 0.7978846
    %v748 = vmul.f32 %v684, 0.7978846
    %v749 = vmul.f32 %v685, 0.7978846
    %v750 = vmul.f32 %v686, 0.7978846
    %v751 = vmul.f32 %v687, 0.7978846
    %v752 = vmul.f32 %v688, 0.7978846
    %v753 = vmul.f32 %v689, 0.7978846
    %v754 = vmul.f32 %v690, 0.7978846
    %v755 = vmul.f32 %v691, 0.7978846
    %v756 = vmul.f32 %v692, 0.7978846
    %v757 = vmul.f32 %v693, 0.7978846
    %v758 = vmul.f32 %v694, 0.7978846
    %v759 = vmul.f32 %v695, 0.7978846
    %v760 = vmul.f32 %v696, 0.7978846
    %v761 = vmul.f32 %v697, 0.7978846
    %v762 = vmul.f32 %v698, 0.7978846
    %v763 = vmul.f32 %v699, 0.7978846
    %v764 = vmul.f32 %v700, 0.7978846
    %v765 = vmul.f32 %v701, 0.7978846
    %v766 = vmul.f32 %v702, 0.7978846
    %v767 = vmul.f32 %v703, 0.7978846
    %v768 = vtanh.pop %v704
    %v769 = vtanh.pop %v705
    %v770 = vtanh.pop %v706
    %v771 = vtanh.pop %v707
    %v772 = vtanh.pop %v708
    %v773 = vtanh.pop %v709
    %v774 = vtanh.pop %v710
    %v775 = vtanh.pop %v711
    %v776 = vtanh.pop %v712
    %v777 = vtanh.pop %v713
    %v778 = vtanh.pop %v714
    %v779 = vtanh.pop %v715
    %v780 = vtanh.pop %v716
    %v781 = vtanh.pop %v717
    %v782 = vtanh.pop %v718
    %v783 = vtanh.pop %v719
    %v784 = vtanh.pop %v720
    %v785 = vtanh.pop %v721
    %v786 = vtanh.pop %v722
    %v787 = vtanh.pop %v723
    %v788 = vtanh.pop %v724
    %v789 = vtanh.pop %v725
    %v790 = vtanh.pop %v726
    %v791 = vtanh.pop %v727
    %v792 = vtanh.pop %v728
    %v793 = vtanh.pop %v729
    %v794 = vtanh.pop %v730
    %v795 = vtanh.pop %v731
    %v796 = vtanh.pop %v732
    %v797 = vtanh.pop %v733
    %v798 = vtanh.pop %v734
    %v799 = vtanh.pop %v735
    %v800 = vtanh.pop %v736
    %v801 = vtanh.pop %v737
    %v802 = vtanh.pop %v738
    %v803 = vtanh.pop %v739
    %v804 = vtanh.pop %v740
    %v805 = vtanh.pop %v741
    %v806 = vtanh.pop %v742
    %v807 = vtanh.pop %v743
    %v808 = vtanh.pop %v744
    %v809 = vtanh.pop %v745
    %v810 = vtanh.pop %v746
    %v811 = vtanh.pop %v747
    %v812 = vtanh.pop %v748
    %v813 = vtanh.pop %v749
    %v814 = vtanh.pop %v750
    %v815 = vtanh.pop %v751
    %v816 = vtanh.pop %v752
    %v817 = vtanh.pop %v753
    %v818 = vtanh.pop %v754
    %v819 = vtanh.pop %v755
    %v820 = vtanh.pop %v756
    %v821 = vtanh.pop %v757
    %v822 = vtanh.pop %v758
    %v823 = vtanh.pop %v759
    %v824 = vtanh.pop %v760
    %v825 = vtanh.pop %v761
    %v826 = vtanh.pop %v762
    %v827 = vtanh.pop %v763
    %v828 = vtanh.pop %v764
    %v829 = vtanh.pop %v765
    %v830 = vtanh.pop %v766
    %v831 = vtanh.pop %v767
    %v832 = vadd.f32 %v768, 1.0
    %v833 = vadd.f32 %v769, 1.0
    %v834 = vadd.f32 %v770, 1.0
    %v835 = vadd.f32 %v771, 1.0
    %v836 = vadd.f32 %v772, 1.0
    %v837 = vadd.f32 %v773, 1.0
    %v838 = vadd.f32 %v774, 1.0
    %v839 = vadd.f32 %v775, 1.0
    %v840 = vadd.f32 %v776, 1.0
    %v841 = vadd.f32 %v777, 1.0
    %v842 = vadd.f32 %v778, 1.0
    %v843 = vadd.f32 %v779, 1.0
    %v844 = vadd.f32 %v780, 1.0
    %v845 = vadd.f32 %v781, 1.0
    %v846 = vadd.f32 %v782, 1.0
    %v847 = vadd.f32 %v783, 1.0
    %v848 = vadd.f32 %v784, 1.0
    %v849 = vadd.f32 %v785, 1.0
    %v850 = vadd.f32 %v786, 1.0
    %v851 = vadd.f32 %v787, 1.0
    %v852 = vadd.f32 %v788, 1.0
    %v853 = vadd.f32 %v789, 1.0
    %v854 = vadd.f32 %v790, 1.0
    %v855 = vadd.f32 %v791, 1.0
    %v856 = vadd.f32 %v792, 1.0
    %v857 = vadd.f32 %v793, 1.0
    %v858 = vadd.f32 %v794, 1.0
    %v859 = vadd.f32 %v795, 1.0
    %v860 = vadd.f32 %v796, 1.0
    %v861 = vadd.f32 %v797, 1.0
    %v862 = vadd.f32 %v798, 1.0
    %v863 = vadd.f32 %v799, 1.0
    %v864 = vadd.f32 %v800, 1.0
    %v865 = vadd.f32 %v801, 1.0
    %v866 = vadd.f32 %v802, 1.0
    %v867 = vadd.f32 %v803, 1.0
    %v868 = vadd.f32 %v804, 1.0
    %v869 = vadd.f32 %v805, 1.0
    %v870 = vadd.f32 %v806, 1.0
    %v871 = vadd.f32 %v807, 1.0
    %v872 = vadd.f32 %v808, 1.0
    %v873 = vadd.f32 %v809, 1.0
    %v874 = vadd.f32 %v810, 1.0
    %v875 = vadd.f32 %v811, 1.0
    %v876 = vadd.f32 %v812, 1.0
    %v877 = vadd.f32 %v813, 1.0
    %v878 = vadd.f32 %v814, 1.0
    %v879 = vadd.f32 %v815, 1.0
    %v880 = vadd.f32 %v816, 1.0
    %v881 = vadd.f32 %v817, 1.0
    %v882 = vadd.f32 %v818, 1.0
    %v883 = vadd.f32 %v819, 1.0
    %v884 = vadd.f32 %v820, 1.0
    %v885 = vadd.f32 %v821, 1.0
    %v886 = vadd.f32 %v822, 1.0
    %v887 = vadd.f32 %v823, 1.0
    %v888 = vadd.f32 %v824, 1.0
    %v889 = vadd.f32 %v825, 1.0
    %v890 = vadd.f32 %v826, 1.0
    %v891 = vadd.f32 %v827, 1.0
    %v892 = vadd.f32 %v828, 1.0
    %v893 = vadd.f32 %v829, 1.0
    %v894 = vadd.f32 %v830, 1.0
    %v895 = vadd.f32 %v831, 1.0
    %v896 = vmul.f32 %v832, 0.5
    %v897 = vmul.f32 %v833, 0.5
    %v898 = vmul.f32 %v834, 0.5
    %v899 = vmul.f32 %v835, 0.5
    %v900 = vmul.f32 %v836, 0.5
    %v901 = vmul.f32 %v837, 0.5
    %v902 = vmul.f32 %v838, 0.5
    %v903 = vmul.f32 %v839, 0.5
    %v904 = vmul.f32 %v840, 0.5
    %v905 = vmul.f32 %v841, 0.5
    %v906 = vmul.f32 %v842, 0.5
    %v907 = vmul.f32 %v843, 0.5
    %v908 = vmul.f32 %v844, 0.5
    %v909 = vmul.f32 %v845, 0.5
    %v910 = vmul.f32 %v846, 0.5
    %v911 = vmul.f32 %v847, 0.5
    %v912 = vmul.f32 %v848, 0.5
    %v913 = vmul.f32 %v849, 0.5
    %v914 = vmul.f32 %v850, 0.5
    %v915 = vmul.f32 %v851, 0.5
    %v916 = vmul.f32 %v852, 0.5
    %v917 = vmul.f32 %v853, 0.5
    %v918 = vmul.f32 %v854, 0.5
    %v919 = vmul.f32 %v855, 0.5
    %v920 = vmul.f32 %v856, 0.5
    %v921 = vmul.f32 %v857, 0.5
    %v922 = vmul.f32 %v858, 0.5
    %v923 = vmul.f32 %v859, 0.5
    %v924 = vmul.f32 %v860, 0.5
    %v925 = vmul.f32 %v861, 0.5
    %v926 = vmul.f32 %v862, 0.5
    %v927 = vmul.f32 %v863, 0.5
    %v928 = vmul.f32 %v864, 0.5
    %v929 = vmul.f32 %v865, 0.5
    %v930 = vmul.f32 %v866, 0.5
    %v931 = vmul.f32 %v867, 0.5
    %v932 = vmul.f32 %v868, 0.5
    %v933 = vmul.f32 %v869, 0.5
    %v934 = vmul.f32 %v870, 0.5
    %v935 = vmul.f32 %v871, 0.5
    %v936 = vmul.f32 %v872, 0.5
    %v937 = vmul.f32 %v873, 0.5
    %v938 = vmul.f32 %v874, 0.5
    %v939 = vmul.f32 %v875, 0.5
    %v940 = vmul.f32 %v876, 0.5
    %v941 = vmul.f32 %v877, 0.5
    %v942 = vmul.f32 %v878, 0.5
    %v943 = vmul.f32 %v879, 0.5
    %v944 = vmul.f32 %v880, 0.5
    %v945 = vmul.f32 %v881, 0.5
    %v946 = vmul.f32 %v882, 0.5
    %v947 = vmul.f32 %v883, 0.5
    %v948 = vmul.f32 %v884, 0.5
    %v949 = vmul.f32 %v885, 0.5
    %v950 = vmul.f32 %v886, 0.5
    %v951 = vmul.f32 %v887, 0.5
    %v952 = vmul.f32 %v888, 0.5
    %v953 = vmul.f32 %v889, 0.5
    %v954 = vmul.f32 %v890, 0.5
    %v955 = vmul.f32 %v891, 0.5
    %v956 = vmul.f32 %v892, 0.5
    %v957 = vmul.f32 %v893, 0.5
    %v958 = vmul.f32 %v894, 0.5
    %v959 = vmul.f32 %v895, 0.5
    %v960 = vmul.f32 %v290, %v896
    %v961 = vmul.f32 %v292, %v897
    %v962 = vmul.f32 %v294, %v898
    %v963 = vmul.f32 %v296, %v899
    %v964 = vmul.f32 %v300, %v900
    %v965 = vmul.f32 %v302, %v901
    %v966 = vmul.f32 %v304, %v902
    %v967 = vmul.f32 %v306, %v903
    %v968 = vmul.f32 %v310, %v904
    %v969 = vmul.f32 %v312, %v905
    %v970 = vmul.f32 %v314, %v906
    %v971 = vmul.f32 %v316, %v907
    %v972 = vmul.f32 %v320, %v908
    %v973 = vmul.f32 %v322, %v909
    %v974 = vmul.f32 %v324, %v910
    %v975 = vmul.f32 %v326, %v911
    %v976 = vmul.f32 %v330, %v912
    %v977 = vmul.f32 %v332, %v913
    %v978 = vmul.f32 %v334, %v914
    %v979 = vmul.f32 %v336, %v915
    %v980 = vmul.f32 %v340, %v916
    %v981 = vmul.f32 %v342, %v917
    %v982 = vmul.f32 %v344, %v918
    %v983 = vmul.f32 %v346, %v919
    %v984 = vmul.f32 %v350, %v920
    %v985 = vmul.f32 %v352, %v921
    %v986 = vmul.f32 %v354, %v922
    %v987 = vmul.f32 %v356, %v923
    %v988 = vmul.f32 %v360, %v924
    %v989 = vmul.f32 %v362, %v925
    %v990 = vmul.f32 %v364, %v926
    %v991 = vmul.f32 %v366, %v927
    %v992 = vmul.f32 %v370, %v928
    %v993 = vmul.f32 %v372, %v929
    %v994 = vmul.f32 %v374, %v930
    %v995 = vmul.f32 %v376, %v931
    %v996 = vmul.f32 %v380, %v932
    %v997 = vmul.f32 %v382, %v933
    %v998 = vmul.f32 %v384, %v934
    %v999 = vmul.f32 %v386, %v935
    %v1000 = vmul.f32 %v390, %v936
    %v1001 = vmul.f32 %v392, %v937
    %v1002 = vmul.f32 %v394, %v938
    %v1003 = vmul.f32 %v396, %v939
    %v1004 = vmul.f32 %v400, %v940
    %v1005 = vmul.f32 %v402, %v941
    %v1006 = vmul.f32 %v404, %v942
    %v1007 = vmul.f32 %v406, %v943
    %v1008 = vmul.f32 %v410, %v944
    %v1009 = vmul.f32 %v412, %v945
    %v1010 = vmul.f32 %v414, %v946
    %v1011 = vmul.f32 %v416, %v947
    %v1012 = vmul.f32 %v420, %v948
    %v1013 = vmul.f32 %v422, %v949
    %v1014 = vmul.f32 %v424, %v950
    %v1015 = vmul.f32 %v426, %v951
    %v1016 = vmul.f32 %v430, %v952
    %v1017 = vmul.f32 %v432, %v953
    %v1018 = vmul.f32 %v434, %v954
    %v1019 = vmul.f32 %v436, %v955
    %v1020 = vmul.f32 %v440, %v956
    %v1021 = vmul.f32 %v442, %v957
    %v1022 = vmul.f32 %v444, %v958
    %v1023 = vmul.f32 %v446, %v959
    %v1024 = vld [vmem:[#allocation2] sm:$0xff]
    %v1025 = vld [vmem:[#allocation2 + $0x8] sm:$0xff]
    %v1026 = vld [vmem:[#allocation2 + $0x10] sm:$0xff]
    %v1027 = vld [vmem:[#allocation2 + $0x18] sm:$0xff]
    %v1028 = vld [vmem:[#allocation2 + $0x20] sm:$0xff]
    %v1029 = vld [vmem:[#allocation2 + $0x28] sm:$0xff]
    %v1030 = vld [vmem:[#allocation2 + $0x30] sm:$0xff]
    %v1031 = vld [vmem:[#allocation2 + $0x38] sm:$0xff]
    %v1032 = vld [vmem:[#allocation2 + $0x40] sm:$0xff]
    %v1033 = vld [vmem:[#allocation2 + $0x48] sm:$0xff]
    %v1034 = vld [vmem:[#allocation2 + $0x50] sm:$0xff]
    %v1035 = vld [vmem:[#allocation2 + $0x58] sm:$0xff]
    %v1036 = vld [vmem:[#allocation2 + $0x60] sm:$0xff]
    %v1037 = vld [vmem:[#allocation2 + $0x68] sm:$0xff]
    %v1038 = vld [vmem:[#allocation2 + $0x70] sm:$0xff]
    %v1039 = vld [vmem:[#allocation2 + $0x78] sm:$0xff]
    %v1040 = vld [vmem:[#allocation2 + $0x80] sm:$0xff]
    %v1041 = vld [vmem:[#allocation2 + $0x88] sm:$0xff]
    %v1042 = vld [vmem:[#allocation2 + $0x90] sm:$0xff]
    %v1043 = vld [vmem:[#allocation2 + $0x98] sm:$0xff]
    %v1044 = vld [vmem:[#allocation2 + $0xa0] sm:$0xff]
    %v1045 = vld [vmem:[#allocation2 + $0xa8] sm:$0xff]
    %v1046 = vld [vmem:[#allocation2 + $0xb0] sm:$0xff]
    %v1047 = vld [vmem:[#allocation2 + $0xb8] sm:$0xff]
    %v1048 = vld [vmem:[#allocation2 + $0xc0] sm:$0xff]
    %v1049 = vld [vmem:[#allocation2 + $0xc8] sm:$0xff]
    %v1050 = vld [vmem:[#allocation2 + $0xd0] sm:$0xff]
    %v1051 = vld [vmem:[#allocation2 + $0xd8] sm:$0xff]
    %v1052 = vld [vmem:[#allocation2 + $0xe0] sm:$0xff]
    %v1053 = vld [vmem:[#allocation2 + $0xe8] sm:$0xff]
    %v1054 = vld [vmem:[#allocation2 + $0xf0] sm:$0xff]
    %v1055 = vld [vmem:[#allocation2 + $0xf8] sm:$0xff]
    %v1056 = vpack.c.bf16 %v962, %v960
    %v1057 = vpack.c.bf16 %v963, %v961
    %v1058 = vpack.c.bf16 %v966, %v964
    %v1059 = vpack.c.bf16 %v967, %v965
    %v1060 = vpack.c.bf16 %v970, %v968
    %v1061 = vpack.c.bf16 %v971, %v969
    %v1062 = vpack.c.bf16 %v974, %v972
    %v1063 = vpack.c.bf16 %v975, %v973
    %v1064 = vpack.c.bf16 %v978, %v976
    %v1065 = vpack.c.bf16 %v979, %v977
    %v1066 = vpack.c.bf16 %v982, %v980
    %v1067 = vpack.c.bf16 %v983, %v981
    %v1068 = vpack.c.bf16 %v986, %v984
    %v1069 = vpack.c.bf16 %v987, %v985
    %v1070 = vpack.c.bf16 %v990, %v988
    %v1071 = vpack.c.bf16 %v991, %v989
    %v1072 = vpack.c.bf16 %v994, %v992
    %v1073 = vpack.c.bf16 %v995, %v993
    %v1074 = vpack.c.bf16 %v998, %v996
    %v1075 = vpack.c.bf16 %v999, %v997
    %v1076 = vpack.c.bf16 %v1002, %v1000
    %v1077 = vpack.c.bf16 %v1003, %v1001
    %v1078 = vpack.c.bf16 %v1006, %v1004
    %v1079 = vpack.c.bf16 %v1007, %v1005
    %v1080 = vpack.c.bf16 %v1010, %v1008
    %v1081 = vpack.c.bf16 %v1011, %v1009
    %v1082 = vpack.c.bf16 %v1014, %v1012
    %v1083 = vpack.c.bf16 %v1015, %v1013
    %v1084 = vpack.c.bf16 %v1018, %v1016
    %v1085 = vpack.c.bf16 %v1019, %v1017
    %v1086 = vpack.c.bf16 %v1022, %v1020
    %v1087 = vpack.c.bf16 %v1023, %v1021
    %v1088 = vld [vmem:[#allocation8] sm:$0xf]
    %v1089 = vld [vmem:[#allocation8 + $0x4] sm:$0xf]
    %v1090 = vld [vmem:[#allocation8 + $0x8] sm:$0xf]
    %v1091 = vld [vmem:[#allocation8 + $0xc] sm:$0xf]
    %v1092 = vld [vmem:[#allocation8 + $0x10] sm:$0xf]
    %v1093 = vld [vmem:[#allocation8 + $0x14] sm:$0xf]
    %v1094 = vld [vmem:[#allocation8 + $0x18] sm:$0xf]
    %v1095 = vld [vmem:[#allocation8 + $0x1c] sm:$0xf]
    %v1096 = vld [vmem:[#allocation8 + $0x20] sm:$0xf]
    %v1097 = vld [vmem:[#allocation8 + $0x24] sm:$0xf]
    %v1098 = vld [vmem:[#allocation8 + $0x28] sm:$0xf]
    %v1099 = vld [vmem:[#allocation8 + $0x2c] sm:$0xf]
    %v1100 = vld [vmem:[#allocation8 + $0x30] sm:$0xf]
    %v1101 = vld [vmem:[#allocation8 + $0x34] sm:$0xf]
    %v1102 = vld [vmem:[#allocation8 + $0x38] sm:$0xf]
    %v1103 = vld [vmem:[#allocation8 + $0x3c] sm:$0xf]
    %v1104 = vld [vmem:[#allocation8 + $0x40] sm:$0xf]
    %v1105 = vld [vmem:[#allocation8 + $0x44] sm:$0xf]
    %v1106 = vld [vmem:[#allocation8 + $0x48] sm:$0xf]
    %v1107 = vld [vmem:[#allocation8 + $0x4c] sm:$0xf]
    %v1108 = vld [vmem:[#allocation8 + $0x50] sm:$0xf]
    %v1109 = vld [vmem:[#allocation8 + $0x54] sm:$0xf]
    %v1110 = vld [vmem:[#allocation8 + $0x58] sm:$0xf]
    %v1111 = vld [vmem:[#allocation8 + $0x5c] sm:$0xf]
    %v1112 = vld [vmem:[#allocation8 + $0x60] sm:$0xf]
    %v1113 = vld [vmem:[#allocation8 + $0x64] sm:$0xf]
    %v1114 = vld [vmem:[#allocation8 + $0x68] sm:$0xf]
    %v1115 = vld [vmem:[#allocation8 + $0x6c] sm:$0xf]
    %v1116 = vld [vmem:[#allocation8 + $0x70] sm:$0xf]
    %v1117 = vld [vmem:[#allocation8 + $0x74] sm:$0xf]
    %v1118 = vld [vmem:[#allocation8 + $0x78] sm:$0xf]
    %v1119 = vld [vmem:[#allocation8 + $0x7c] sm:$0xf]
    %v1152 = vunpack.c.l.b16 %v1088
    %v1153 = vunpack.c.l.b16 %v1089
    %v1154 = vunpack.c.l.b16 %v1090
    %v1155 = vunpack.c.l.b16 %v1091
    %v1156 = vunpack.c.l.b16 %v1092
    %v1157 = vunpack.c.l.b16 %v1093
    %v1158 = vunpack.c.l.b16 %v1094
    %v1159 = vunpack.c.l.b16 %v1095
    %v1160 = vunpack.c.l.b16 %v1096
    %v1161 = vunpack.c.l.b16 %v1097
    %v1162 = vunpack.c.l.b16 %v1098
    %v1163 = vunpack.c.l.b16 %v1099
    %v1164 = vunpack.c.l.b16 %v1100
    %v1165 = vunpack.c.l.b16 %v1101
    %v1166 = vunpack.c.l.b16 %v1102
    %v1167 = vunpack.c.l.b16 %v1103
    %v1168 = vunpack.c.l.b16 %v1104
    %v1169 = vunpack.c.l.b16 %v1105
    %v1170 = vunpack.c.l.b16 %v1106
    %v1171 = vunpack.c.l.b16 %v1107
    %v1172 = vunpack.c.l.b16 %v1108
    %v1173 = vunpack.c.l.b16 %v1109
    %v1174 = vunpack.c.l.b16 %v1110
    %v1175 = vunpack.c.l.b16 %v1111
    %v1176 = vunpack.c.l.b16 %v1112
    %v1177 = vunpack.c.l.b16 %v1113
    %v1178 = vunpack.c.l.b16 %v1114
    %v1179 = vunpack.c.l.b16 %v1115
    %v1180 = vunpack.c.l.b16 %v1116
    %v1181 = vunpack.c.l.b16 %v1117
    %v1182 = vunpack.c.l.b16 %v1118
    %v1183 = vunpack.c.l.b16 %v1119
    %v1184 = vpack.c.b16 %v1153, %v1152
    %v1185 = vpack.c.b16 %v1155, %v1154
    %v1186 = vpack.c.b16 %v1157, %v1156
    %v1187 = vpack.c.b16 %v1159, %v1158
    %v1188 = vpack.c.b16 %v1161, %v1160
    %v1189 = vpack.c.b16 %v1163, %v1162
    %v1190 = vpack.c.b16 %v1165, %v1164
    %v1191 = vpack.c.b16 %v1167, %v1166
    %v1192 = vpack.c.b16 %v1169, %v1168
    %v1193 = vpack.c.b16 %v1171, %v1170
    %v1194 = vpack.c.b16 %v1173, %v1172
    %v1195 = vpack.c.b16 %v1175, %v1174
    %v1196 = vpack.c.b16 %v1177, %v1176
    %v1197 = vpack.c.b16 %v1179, %v1178
    %v1198 = vpack.c.b16 %v1181, %v1180
    %v1199 = vpack.c.b16 %v1183, %v1182
    %1216 = vmatprep.subr.bf16.mxu0 0
    %1217 = vmatpush1.bf16.msra.mxu0 %v1184
    %1218 = vmatprep.subr.bf16.mxu0 0
    %1219 = vmatpush1.bf16.msra.mxu0 %v1185
    %1220 = vmatprep.subr.bf16.mxu0 0
    %1221 = vmatpush1.bf16.msra.mxu0 %v1186
    %1222 = vmatprep.subr.bf16.mxu0 0
    %1223 = vmatpush1.bf16.msra.mxu0 %v1187
    %1224 = vmatprep.subr.bf16.mxu0 0
    %1225 = vmatpush1.bf16.msra.mxu0 %v1188
    %1226 = vmatprep.subr.bf16.mxu0 0
    %1227 = vmatpush1.bf16.msra.mxu0 %v1189
    %1228 = vmatprep.subr.bf16.mxu0 0
    %1229 = vmatpush1.bf16.msra.mxu0 %v1190
    %1230 = vmatprep.subr.bf16.mxu0 0
    %1231 = vmatpush1.bf16.msra.mxu0 %v1191
    %1232 = vmatprep.subr.bf16.mxu0 0
    %1233 = vmatpush1.bf16.msra.mxu0 %v1192
    %1234 = vmatprep.subr.bf16.mxu0 0
    %1235 = vmatpush1.bf16.msra.mxu0 %v1193
    %1236 = vmatprep.subr.bf16.mxu0 0
    %1237 = vmatpush1.bf16.msra.mxu0 %v1194
    %1238 = vmatprep.subr.bf16.mxu0 0
    %1239 = vmatpush1.bf16.msra.mxu0 %v1195
    %1240 = vmatprep.subr.bf16.mxu0 0
    %1241 = vmatpush1.bf16.msra.mxu0 %v1196
    %1242 = vmatprep.subr.bf16.mxu0 0
    %1243 = vmatpush1.bf16.msra.mxu0 %v1197
    %1244 = vmatprep.subr.bf16.mxu0 0
    %1245 = vmatpush1.bf16.msra.mxu0 %v1198
    %1246 = vmatprep.subr.bf16.mxu0 0
    %1247 = vmatpush1.bf16.msra.mxu0 %v1199
    %1248 = vmatprep.mubr.bf16.mxu0 %v1057
    %1249 = vmatmul.mubr.bf16.gmra.mrb[0].mxu0 %v1056
    %v1250 = vpop.f32.mrb[0].mxu0
    %v1251 = vadd.f32 0.0, %v1250
    %v1252 = vpop.f32.mrb[0].mxu0
    %v1253 = vpop.f32.mrb[0].mxu0
    %v1254 = vadd.f32 0.0, %v1253
    %v1255 = vpop.f32.mrb[0].mxu0
    %1256 = vmatprep.mubr.bf16.mxu0 %v1059
    %1257 = vmatmul.mubr.bf16.gmra.mrb[0].mxu0 %v1058
    %v1258 = vpop.f32.mrb[0].mxu0
    %v1259 = vadd.f32 0.0, %v1258
    %v1260 = vpop.f32.mrb[0].mxu0
    %v1261 = vpop.f32.mrb[0].mxu0
    %v1262 = vadd.f32 0.0, %v1261
    %v1263 = vpop.f32.mrb[0].mxu0
    %1264 = vmatprep.mubr.bf16.mxu0 %v1061
    %1265 = vmatmul.mubr.bf16.gmra.mrb[0].mxu0 %v1060
    %v1266 = vpop.f32.mrb[0].mxu0
    %v1267 = vadd.f32 0.0, %v1266
    %v1268 = vpop.f32.mrb[0].mxu0
    %v1269 = vpop.f32.mrb[0].mxu0
    %v1270 = vadd.f32 0.0, %v1269
    %v1271 = vpop.f32.mrb[0].mxu0
    %1272 = vmatprep.mubr.bf16.mxu0 %v1063
    %1273 = vmatmul.mubr.bf16.gmra.mrb[0].mxu0 %v1062
    %v1274 = vpop.f32.mrb[0].mxu0
    %v1275 = vadd.f32 0.0, %v1274
    %v1276 = vpop.f32.mrb[0].mxu0
    %v1277 = vpop.f32.mrb[0].mxu0
    %v1278 = vadd.f32 0.0, %v1277
    %v1279 = vpop.f32.mrb[0].mxu0
    %1280 = vmatprep.mubr.bf16.mxu0 %v1065
    %1281 = vmatmul.mubr.bf16.gmra.mrb[0].mxu0 %v1064
    %v1282 = vpop.f32.mrb[0].mxu0
    %v1283 = vadd.f32 0.0, %v1282
    %v1284 = vpop.f32.mrb[0].mxu0
    %v1285 = vpop.f32.mrb[0].mxu0
    %v1286 = vadd.f32 0.0, %v1285
    %v1287 = vpop.f32.mrb[0].mxu0
    %1288 = vmatprep.mubr.bf16.mxu0 %v1067
    %1289 = vmatmul.mubr.bf16.gmra.mrb[0].mxu0 %v1066
    %v1290 = vpop.f32.mrb[0].mxu0
    %v1291 = vadd.f32 0.0, %v1290
    %v1292 = vpop.f32.mrb[0].mxu0
    %v1293 = vpop.f32.mrb[0].mxu0
    %v1294 = vadd.f32 0.0, %v1293
    %v1295 = vpop.f32.mrb[0].mxu0
    %1296 = vmatprep.mubr.bf16.mxu0 %v1069
    %1297 = vmatmul.mubr.bf16.gmra.mrb[0].mxu0 %v1068
    %v1298 = vpop.f32.mrb[0].mxu0
    %v1299 = vadd.f32 0.0, %v1298
    %v1300 = vpop.f32.mrb[0].mxu0
    %v1301 = vpop.f32.mrb[0].mxu0
    %v1302 = vadd.f32 0.0, %v1301
    %v1303 = vpop.f32.mrb[0].mxu0
    %1304 = vmatprep.mubr.bf16.mxu0 %v1071
    %1305 = vmatmul.mubr.bf16.gmra.mrb[0].mxu0 %v1070
    %v1306 = vpop.f32.mrb[0].mxu0
    %v1307 = vadd.f32 0.0, %v1306
    %v1308 = vpop.f32.mrb[0].mxu0
    %v1309 = vpop.f32.mrb[0].mxu0
    %v1310 = vadd.f32 0.0, %v1309
    %v1311 = vpop.f32.mrb[0].mxu0
    %1312 = vmatprep.mubr.bf16.mxu0 %v1073
    %1313 = vmatmul.mubr.bf16.gmra.mrb[0].mxu0 %v1072
    %v1314 = vpop.f32.mrb[0].mxu0
    %v1315 = vadd.f32 0.0, %v1314
    %v1316 = vpop.f32.mrb[0].mxu0
    %v1317 = vpop.f32.mrb[0].mxu0
    %v1318 = vadd.f32 0.0, %v1317
    %v1319 = vpop.f32.mrb[0].mxu0
    %1320 = vmatprep.mubr.bf16.mxu0 %v1075
    %1321 = vmatmul.mubr.bf16.gmra.mrb[0].mxu0 %v1074
    %v1322 = vpop.f32.mrb[0].mxu0
    %v1323 = vadd.f32 0.0, %v1322
    %v1324 = vpop.f32.mrb[0].mxu0
    %v1325 = vpop.f32.mrb[0].mxu0
    %v1326 = vadd.f32 0.0, %v1325
    %v1327 = vpop.f32.mrb[0].mxu0
    %1328 = vmatprep.mubr.bf16.mxu0 %v1077
    %1329 = vmatmul.mubr.bf16.gmra.mrb[0].mxu0 %v1076
    %v1330 = vpop.f32.mrb[0].mxu0
    %v1331 = vadd.f32 0.0, %v1330
    %v1332 = vpop.f32.mrb[0].mxu0
    %v1333 = vpop.f32.mrb[0].mxu0
    %v1334 = vadd.f32 0.0, %v1333
    %v1335 = vpop.f32.mrb[0].mxu0
    %1336 = vmatprep.mubr.bf16.mxu0 %v1079
    %1337 = vmatmul.mubr.bf16.gmra.mrb[0].mxu0 %v1078
    %v1338 = vpop.f32.mrb[0].mxu0
    %v1339 = vadd.f32 0.0, %v1338
    %v1340 = vpop.f32.mrb[0].mxu0
    %v1341 = vpop.f32.mrb[0].mxu0
    %v1342 = vadd.f32 0.0, %v1341
    %v1343 = vpop.f32.mrb[0].mxu0
    %1344 = vmatprep.mubr.bf16.mxu0 %v1081
    %1345 = vmatmul.mubr.bf16.gmra.mrb[0].mxu0 %v1080
    %v1346 = vpop.f32.mrb[0].mxu0
    %v1347 = vadd.f32 0.0, %v1346
    %v1348 = vpop.f32.mrb[0].mxu0
    %v1349 = vpop.f32.mrb[0].mxu0
    %v1350 = vadd.f32 0.0, %v1349
    %v1351 = vpop.f32.mrb[0].mxu0
    %1352 = vmatprep.mubr.bf16.mxu0 %v1083
    %1353 = vmatmul.mubr.bf16.gmra.mrb[0].mxu0 %v1082
    %v1354 = vpop.f32.mrb[0].mxu0
    %v1355 = vadd.f32 0.0, %v1354
    %v1356 = vpop.f32.mrb[0].mxu0
    %v1357 = vpop.f32.mrb[0].mxu0
    %v1358 = vadd.f32 0.0, %v1357
    %v1359 = vpop.f32.mrb[0].mxu0
    %1360 = vmatprep.mubr.bf16.mxu0 %v1085
    %1361 = vmatmul.mubr.bf16.gmra.mrb[0].mxu0 %v1084
    %v1362 = vpop.f32.mrb[0].mxu0
    %v1363 = vadd.f32 0.0, %v1362
    %v1364 = vpop.f32.mrb[0].mxu0
    %v1365 = vpop.f32.mrb[0].mxu0
    %v1366 = vadd.f32 0.0, %v1365
    %v1367 = vpop.f32.mrb[0].mxu0
    %1368 = vmatprep.mubr.bf16.mxu0 %v1087
    %1369 = vmatmul.mubr.bf16.gmra.mrb[0].mxu0 %v1086
    %v1370 = vpop.f32.mrb[0].mxu0
    %v1371 = vadd.f32 0.0, %v1370
    %v1372 = vpop.f32.mrb[0].mxu0
    %v1373 = vpop.f32.mrb[0].mxu0
    %v1374 = vadd.f32 0.0, %v1373
    %v1375 = vpop.f32.mrb[0].mxu0
    %1376 = vdwg.mxu0
    %v1377 = vadd.f32 %v1024, %v1251
    %v1378 = vadd.f32 %v1025, %v1254
    %v1379 = vadd.f32 %v1026, %v1259
    %v1380 = vadd.f32 %v1027, %v1262
    %v1381 = vadd.f32 %v1028, %v1267
    %v1382 = vadd.f32 %v1029, %v1270
    %v1383 = vadd.f32 %v1030, %v1275
    %v1384 = vadd.f32 %v1031, %v1278
    %v1385 = vadd.f32 %v1032, %v1283
    %v1386 = vadd.f32 %v1033, %v1286
    %v1387 = vadd.f32 %v1034, %v1291
    %v1388 = vadd.f32 %v1035, %v1294
    %v1389 = vadd.f32 %v1036, %v1299
    %v1390 = vadd.f32 %v1037, %v1302
    %v1391 = vadd.f32 %v1038, %v1307
    %v1392 = vadd.f32 %v1039, %v1310
    %v1393 = vadd.f32 %v1040, %v1315
    %v1394 = vadd.f32 %v1041, %v1318
    %v1395 = vadd.f32 %v1042, %v1323
    %v1396 = vadd.f32 %v1043, %v1326
    %v1397 = vadd.f32 %v1044, %v1331
    %v1398 = vadd.f32 %v1045, %v1334
    %v1399 = vadd.f32 %v1046, %v1339
    %v1400 = vadd.f32 %v1047, %v1342
    %v1401 = vadd.f32 %v1048, %v1347
    %v1402 = vadd.f32 %v1049, %v1350
    %v1403 = vadd.f32 %v1050, %v1355
    %v1404 = vadd.f32 %v1051, %v1358
    %v1405 = vadd.f32 %v1052, %v1363
    %v1406 = vadd.f32 %v1053, %v1366
    %v1407 = vadd.f32 %v1054, %v1371
    %v1408 = vadd.f32 %v1055, %v1374
    %1409 = vst [vmem:[#allocation2] sm:$0xff] %v1377
    %1410 = vst [vmem:[#allocation2 + $0x8] sm:$0xff] %v1378
    %1411 = vst [vmem:[#allocation2 + $0x10] sm:$0xff] %v1379
    %1412 = vst [vmem:[#allocation2 + $0x18] sm:$0xff] %v1380
    %1413 = vst [vmem:[#allocation2 + $0x20] sm:$0xff] %v1381
    %1414 = vst [vmem:[#allocation2 + $0x28] sm:$0xff] %v1382
    %1415 = vst [vmem:[#allocation2 + $0x30] sm:$0xff] %v1383
    %1416 = vst [vmem:[#allocation2 + $0x38] sm:$0xff] %v1384
    %1417 = vst [vmem:[#allocation2 + $0x40] sm:$0xff] %v1385
    %1418 = vst [vmem:[#allocation2 + $0x48] sm:$0xff] %v1386
    %1419 = vst [vmem:[#allocation2 + $0x50] sm:$0xff] %v1387
    %1420 = vst [vmem:[#allocation2 + $0x58] sm:$0xff] %v1388
    %1421 = vst [vmem:[#allocation2 + $0x60] sm:$0xff] %v1389
    %1422 = vst [vmem:[#allocation2 + $0x68] sm:$0xff] %v1390
    %1423 = vst [vmem:[#allocation2 + $0x70] sm:$0xff] %v1391
    %1424 = vst [vmem:[#allocation2 + $0x78] sm:$0xff] %v1392
    %1425 = vst [vmem:[#allocation2 + $0x80] sm:$0xff] %v1393
    %1426 = vst [vmem:[#allocation2 + $0x88] sm:$0xff] %v1394
    %1427 = vst [vmem:[#allocation2 + $0x90] sm:$0xff] %v1395
    %1428 = vst [vmem:[#allocation2 + $0x98] sm:$0xff] %v1396
    %1429 = vst [vmem:[#allocation2 + $0xa0] sm:$0xff] %v1397
    %1430 = vst [vmem:[#allocation2 + $0xa8] sm:$0xff] %v1398
    %1431 = vst [vmem:[#allocation2 + $0xb0] sm:$0xff] %v1399
    %1432 = vst [vmem:[#allocation2 + $0xb8] sm:$0xff] %v1400
    %1433 = vst [vmem:[#allocation2 + $0xc0] sm:$0xff] %v1401
    %1434 = vst [vmem:[#allocation2 + $0xc8] sm:$0xff] %v1402
    %1435 = vst [vmem:[#allocation2 + $0xd0] sm:$0xff] %v1403
    %1436 = vst [vmem:[#allocation2 + $0xd8] sm:$0xff] %v1404
    %1437 = vst [vmem:[#allocation2 + $0xe0] sm:$0xff] %v1405
    %1438 = vst [vmem:[#allocation2 + $0xe8] sm:$0xff] %v1406
    %1439 = vst [vmem:[#allocation2 + $0xf0] sm:$0xff] %v1407
    %1440 = vst [vmem:[#allocation2 + $0xf8] sm:$0xff] %v1408
    // Predicated region
    $region38: #{mlp_pallas.1} parent=1 // pred_check
      %p1441 = pneg %p63
    $region39: #{mlp_pallas.1} parent=1 // pred_check_branch
      %1443 = sbr.rel (%p1441) target = $region41
    $region40: #{mlp_pallas.1} parent=1 // pred_region
      %v1444 = vld [vmem:[#allocation2] sm:$0xff]
      %v1445 = vld [vmem:[#allocation2 + $0x8] sm:$0xff]
      %v1446 = vld [vmem:[#allocation2 + $0x10] sm:$0xff]
      %v1447 = vld [vmem:[#allocation2 + $0x18] sm:$0xff]
      %v1448 = vld [vmem:[#allocation2 + $0x20] sm:$0xff]
      %v1449 = vld [vmem:[#allocation2 + $0x28] sm:$0xff]
      %v1450 = vld [vmem:[#allocation2 + $0x30] sm:$0xff]
      %v1451 = vld [vmem:[#allocation2 + $0x38] sm:$0xff]
      %v1452 = vld [vmem:[#allocation2 + $0x40] sm:$0xff]
      %v1453 = vld [vmem:[#allocation2 + $0x48] sm:$0xff]
      %v1454 = vld [vmem:[#allocation2 + $0x50] sm:$0xff]
      %v1455 = vld [vmem:[#allocation2 + $0x58] sm:$0xff]
      %v1456 = vld [vmem:[#allocation2 + $0x60] sm:$0xff]
      %v1457 = vld [vmem:[#allocation2 + $0x68] sm:$0xff]
      %v1458 = vld [vmem:[#allocation2 + $0x70] sm:$0xff]
      %v1459 = vld [vmem:[#allocation2 + $0x78] sm:$0xff]
      %v1460 = vld [vmem:[#allocation2 + $0x80] sm:$0xff]
      %v1461 = vld [vmem:[#allocation2 + $0x88] sm:$0xff]
      %v1462 = vld [vmem:[#allocation2 + $0x90] sm:$0xff]
      %v1463 = vld [vmem:[#allocation2 + $0x98] sm:$0xff]
      %v1464 = vld [vmem:[#allocation2 + $0xa0] sm:$0xff]
      %v1465 = vld [vmem:[#allocation2 + $0xa8] sm:$0xff]
      %v1466 = vld [vmem:[#allocation2 + $0xb0] sm:$0xff]
      %v1467 = vld [vmem:[#allocation2 + $0xb8] sm:$0xff]
      %v1468 = vld [vmem:[#allocation2 + $0xc0] sm:$0xff]
      %v1469 = vld [vmem:[#allocation2 + $0xc8] sm:$0xff]
      %v1470 = vld [vmem:[#allocation2 + $0xd0] sm:$0xff]
      %v1471 = vld [vmem:[#allocation2 + $0xd8] sm:$0xff]
      %v1472 = vld [vmem:[#allocation2 + $0xe0] sm:$0xff]
      %v1473 = vld [vmem:[#allocation2 + $0xe8] sm:$0xff]
      %v1474 = vld [vmem:[#allocation2 + $0xf0] sm:$0xff]
      %v1475 = vld [vmem:[#allocation2 + $0xf8] sm:$0xff]
      %v1476 = vld [vmem:[%s4] sm:$0x1]
      %v1478 = vlaneseq
      %v1479 = vshrl.u32 %v1478, 7
      %v1480 = vsub.s32 0, %v1479
      %v1481 = vrot.slane %v1476, %v1480
      %v1483 = vadd.f32 %v1444, %v1481
      %v1484 = vadd.f32 %v1445, %v1481
      %v1485 = vadd.f32 %v1446, %v1481
      %v1486 = vadd.f32 %v1447, %v1481
      %v1487 = vadd.f32 %v1448, %v1481
      %v1488 = vadd.f32 %v1449, %v1481
      %v1489 = vadd.f32 %v1450, %v1481
      %v1490 = vadd.f32 %v1451, %v1481
      %v1491 = vadd.f32 %v1452, %v1481
      %v1492 = vadd.f32 %v1453, %v1481
      %v1493 = vadd.f32 %v1454, %v1481
      %v1494 = vadd.f32 %v1455, %v1481
      %v1495 = vadd.f32 %v1456, %v1481
      %v1496 = vadd.f32 %v1457, %v1481
      %v1497 = vadd.f32 %v1458, %v1481
      %v1498 = vadd.f32 %v1459, %v1481
      %v1499 = vadd.f32 %v1460, %v1481
      %v1500 = vadd.f32 %v1461, %v1481
      %v1501 = vadd.f32 %v1462, %v1481
      %v1502 = vadd.f32 %v1463, %v1481
      %v1503 = vadd.f32 %v1464, %v1481
      %v1504 = vadd.f32 %v1465, %v1481
      %v1505 = vadd.f32 %v1466, %v1481
      %v1506 = vadd.f32 %v1467, %v1481
      %v1507 = vadd.f32 %v1468, %v1481
      %v1508 = vadd.f32 %v1469, %v1481
      %v1509 = vadd.f32 %v1470, %v1481
      %v1510 = vadd.f32 %v1471, %v1481
      %v1511 = vadd.f32 %v1472, %v1481
      %v1512 = vadd.f32 %v1473, %v1481
      %v1513 = vadd.f32 %v1474, %v1481
      %v1514 = vadd.f32 %v1475, %v1481
      %1515 = vst [vmem:[#allocation9] sm:$0xff] %v1483
      %1516 = vst [vmem:[#allocation9 + $0x8] sm:$0xff] %v1484
      %1517 = vst [vmem:[#allocation9 + $0x10] sm:$0xff] %v1485
      %1518 = vst [vmem:[#allocation9 + $0x18] sm:$0xff] %v1486
      %1519 = vst [vmem:[#allocation9 + $0x20] sm:$0xff] %v1487
      %1520 = vst [vmem:[#allocation9 + $0x28] sm:$0xff] %v1488
      %1521 = vst [vmem:[#allocation9 + $0x30] sm:$0xff] %v1489
      %1522 = vst [vmem:[#allocation9 + $0x38] sm:$0xff] %v1490
      %1523 = vst [vmem:[#allocation9 + $0x40] sm:$0xff] %v1491
      %1524 = vst [vmem:[#allocation9 + $0x48] sm:$0xff] %v1492
      %1525 = vst [vmem:[#allocation9 + $0x50] sm:$0xff] %v1493
      %1526 = vst [vmem:[#allocation9 + $0x58] sm:$0xff] %v1494
      %1527 = vst [vmem:[#allocation9 + $0x60] sm:$0xff] %v1495
      %1528 = vst [vmem:[#allocation9 + $0x68] sm:$0xff] %v1496
      %1529 = vst [vmem:[#allocation9 + $0x70] sm:$0xff] %v1497
      %1530 = vst [vmem:[#allocation9 + $0x78] sm:$0xff] %v1498
      %1531 = vst [vmem:[#allocation9 + $0x80] sm:$0xff] %v1499
      %1532 = vst [vmem:[#allocation9 + $0x88] sm:$0xff] %v1500
      %1533 = vst [vmem:[#allocation9 + $0x90] sm:$0xff] %v1501
      %1534 = vst [vmem:[#allocation9 + $0x98] sm:$0xff] %v1502
      %1535 = vst [vmem:[#allocation9 + $0xa0] sm:$0xff] %v1503
      %1536 = vst [vmem:[#allocation9 + $0xa8] sm:$0xff] %v1504
      %1537 = vst [vmem:[#allocation9 + $0xb0] sm:$0xff] %v1505
      %1538 = vst [vmem:[#allocation9 + $0xb8] sm:$0xff] %v1506
      %1539 = vst [vmem:[#allocation9 + $0xc0] sm:$0xff] %v1507
      %1540 = vst [vmem:[#allocation9 + $0xc8] sm:$0xff] %v1508
      %1541 = vst [vmem:[#allocation9 + $0xd0] sm:$0xff] %v1509
      %1542 = vst [vmem:[#allocation9 + $0xd8] sm:$0xff] %v1510
      %1543 = vst [vmem:[#allocation9 + $0xe0] sm:$0xff] %v1511
      %1544 = vst [vmem:[#allocation9 + $0xe8] sm:$0xff] %v1512
      %1545 = vst [vmem:[#allocation9 + $0xf0] sm:$0xff] %v1513
      %1546 = vst [vmem:[#allocation9 + $0xf8] sm:$0xff] %v1514
    $region41: #{mlp_pallas.1} parent=1 // pred_fallthru
      _
    // Predicated region
    $region42: #{mlp_pallas.1} parent=1 // pred_check
      _
    $region43: #{mlp_pallas.1} parent=1 // pred_check_branch
      %1548 = sbr.rel (0) target = $region45
    $region44: #{mlp_pallas.1} parent=1 // pred_region
      %s1550 = ssub.s32 4096, 4096
      %1551 = vsyncadd [#allocation5], %s1550
      %s1552 = sshll.u32 [#allocation9], 4
      %s1553 = int_to_ptr.vmem [resolvable:$true] %s1552
      %1558 = dma.vmem_to_hbm [thread:$0]  %s1553, 4096, %s5, [#allocation5], 128, 128, 8
    $region45: #{mlp_pallas.1} parent=1 // pred_fallthru
      _
    // Predicated region
    $region46: #{mlp_pallas.1} parent=1 // pred_check
      _
    $region47: #{mlp_pallas.1} parent=1 // pred_check_branch
      %1560 = sbr.rel (0) target = $region49
    $region48: #{mlp_pallas.1} parent=1 // pred_region
      %1561 = dma.done [#allocation5], 4096
    $region49: #{mlp_pallas.1} parent=1 // pred_fallthru
      _
    %1562 = vsyncpa [#allocation4], 1
    %1563 = vsyncpa [#allocation7], 1
    %1564 = vsyncpa [#allocation5], 1

</llo_original>
